<compile_context>
chip_gen: v7x
topology: tpu7x:2x2x1
jax: 0.10.0
libtpu: 0.0.40
codegen_flags: <defaults>
</compile_context>

<pallas_src>
from collections import namedtuple

import numpy as np
import jax
import jax.numpy as jnp
from jax.experimental import pallas as pl
from jax.experimental.pallas import tpu as pltpu


_LayerCfg = namedtuple(
    "_LayerCfg", "c_in c_out k stride pad l_in l_pad l_full l_out width")


def _make_fused_kernel(cfgs, neg_slope=0.01):
    """Fused multi-layer Conv1d(+LeakyReLU) kernel.

    Positional refs:
      x_ref                 (C_in0, B*L0)        lane-folded raw input
      s_in_ref              (B*L0, B*L_pad0)     0/1 pad+fold selection matrix
      per layer i (3 refs):
        w_ref_i             (K_i, C_out_i, C_in_i)   tap-major weights
        b_ref_i             (C_out_i, 1)             bias column
        s_ref_i             (width_i, next_cols_i)   0/1 column-routing matrix
      o_ref                 (C_out_last, L_slab)     lane-dense output slab
    """
    n = len(cfgs)

    def kernel(*refs):
        x_ref, s_in_ref = refs[0], refs[1]
        layer_refs = refs[2:2 + 3 * n]
        o_ref = refs[2 + 3 * n]

        # Zero-pad + batch-fold the input with one constant selection matmul
        # (no masked scatter stores, no scratch buffer).
        act = jnp.dot(x_ref[...], s_in_ref[...],
                      preferred_element_type=jnp.float32)     # (C_in0, B*L_pad0)

        for i, cfg in enumerate(cfgs):
            w_ref, b_ref, s_ref = layer_refs[3 * i:3 * i + 3]

            # Tap accumulation: contiguous lane slices straight into the MXU.
            acc = jnp.dot(w_ref[0], act[:, 0:cfg.width],
                          preferred_element_type=jnp.float32)
            for k in range(1, cfg.k):
                acc = acc + jnp.dot(w_ref[k], act[:, k:k + cfg.width],
                                    preferred_element_type=jnp.float32)

            # Bias as a broadcast add, fused with LeakyReLU (VPU slots).
            acc = acc + b_ref[...]
            if i < n - 1:
                acc = jnp.where(acc >= 0, acc, neg_slope * acc)

            # One constant 0/1 matmul: drops cross-batch junk columns,
            # decimates stride>1 outputs, and re-inserts the next layer's zero
            # halos (or assembles the lane-dense output slab on the last
            # layer).  Padding columns come out exactly zero.
            act = jnp.dot(acc, s_ref[...], preferred_element_type=jnp.float32)

        o_ref[...] = act.astype(o_ref.dtype)   # single full-lane, unmasked store

    return kernel


def cnn1d_fused_forward(x, w_taps, b_cols, kernel_sizes, strides):
    """x: (B, C_in, L) f32. w_taps[i]: (K, C_out, C_in). b_cols[i]: (C_out, 1)."""
    B, c_in, l_in = (int(d) for d in x.shape)
    n = len(w_taps)

    cfgs = []
    for i in range(n):
        k = int(kernel_sizes[i])
        s = int(strides[i])
        c_out = int(w_taps[i].shape[1])
        pad = k // 2
        l_pad = l_in + 2 * pad
        l_full = l_pad - k + 1                 # stride-1 (full) output length
        l_out = (l_pad - k) // s + 1           # strided output length
        width = (B - 1) * l_pad + l_full       # batch-folded matmul lane width
        cfgs.append(_LayerCfg(c_in, c_out, k, s, pad, l_in, l_pad, l_full,
                              l_out, width))
        c_in, l_in = c_out, l_out

    c_last, l_last = cfgs[-1].c_out, cfgs[-1].l_out
    l_slab = ((B * l_last + 127) // 128) * 128   # lane-dense output slab width

    # ---- host-side constant 0/1 column-routing matrices (tiny) ----
    c0 = cfgs[0]
    s_in = np.zeros((B * c0.l_in, B * c0.l_pad), np.float32)
    for b in range(B):
        for t in range(c0.l_in):
            s_in[b * c0.l_in + t, b * c0.l_pad + c0.pad + t] = 1.0

    sels = []
    for i, cfg in enumerate(cfgs):
        if i < n - 1:
            nxt = cfgs[i + 1]
            s_i = np.zeros((cfg.width, B * nxt.l_pad), np.float32)
            for b in range(B):
                for j in range(cfg.l_out):
                    s_i[b * cfg.l_pad + cfg.stride * j,
                        b * nxt.l_pad + nxt.pad + j] = 1.0
        else:
            s_i = np.zeros((cfg.width, l_slab), np.float32)
            for b in range(B):
                for j in range(cfg.l_out):
                    s_i[b * cfg.l_pad + cfg.stride * j, b * cfg.l_out + j] = 1.0
        sels.append(jnp.asarray(s_i))

    # Lane-folded input layout (layout plumbing only; a few KB).
    x2d = jnp.transpose(x.astype(jnp.float32), (1, 0, 2)).reshape(
        c0.c_in, B * c0.l_in)

    args = [x2d, jnp.asarray(s_in)]
    for i in range(n):
        args += [w_taps[i].astype(jnp.float32),
                 b_cols[i].astype(jnp.float32),
                 sels[i]]

    in_specs = [
        pl.BlockSpec(tuple(int(d) for d in a.shape),
                     lambda i, nd=a.ndim: (0,) * nd)
        for a in args
    ]

    slab = pl.pallas_call(
        _make_fused_kernel(cfgs),
        out_shape=jax.ShapeDtypeStruct((c_last, l_slab), jnp.float32),
        grid=(1,),
        in_specs=in_specs,
        out_specs=pl.BlockSpec((c_last, l_slab), lambda i: (0, 0)),
        compiler_params=pltpu.CompilerParams(
            dimension_semantics=("arbitrary",)),
    )(*args)

    # Strip lane padding, restore (B, C_out, L_out) layout (XLA glue, tiny).
    y = slab[:, :B * l_last].reshape(c_last, B, l_last)
    return jnp.transpose(y, (1, 0, 2))


class CNN1D:
    """JAX/Pallas port of tqdne.model.CNN1D (forward pass only)."""

    def __init__(self, input_channel, n_convs, kernel_sizes, strides, key):
        self.input_channel = input_channel
        self.n_convs = list(n_convs)
        self.kernel_sizes = list(kernel_sizes)
        self.strides = list(strides)
        self.params = []    # original (w, b) per layer (used by the reference)
        self.w_taps = []    # tap-major weights (K, C_out, C_in)
        self.b_cols = []    # bias columns (C_out, 1)
        c_in = input_channel
        for c_out, k in zip(self.n_convs, self.kernel_sizes):
            key, wk, bk = jax.random.split(key, 3)
            # Deterministic PyTorch-like uniform fan-in init.
            bound = 1.0 / float(np.sqrt(c_in * k))
            w = jax.random.uniform(wk, (c_out, c_in, k), jnp.float32, -bound, bound)
            b = jax.random.uniform(bk, (c_out,), jnp.float32, -bound, bound)
            self.params.append((w, b))
            self.w_taps.append(jnp.transpose(w, (2, 0, 1)))   # (K, C_out, C_in)
            self.b_cols.append(b[:, None])                    # (C_out, 1)
            c_in = c_out

    def __call__(self, x):
        squeeze = False
        if x.ndim == 2:          # (C, L) -> (1, C, L), mirroring the torch module
            x = x[None]
            squeeze = True
        assert x.ndim == 3
        y = cnn1d_fused_forward(x.astype(jnp.float32), self.w_taps, self.b_cols,
                                self.kernel_sizes, self.strides)
        if squeeze:
            y = y[0]
        return y


def _reference_forward(model, x):
    """Pure-JAX reference using lax.conv_general_dilated for validation."""
    squeeze = False
    if x.ndim == 2:
        x = x[None]
        squeeze = True
    n = len(model.params)
    for i, ((w, b), stride) in enumerate(zip(model.params, model.strides)):
        k = w.shape[-1]
        pad = k // 2
        x = jax.lax.conv_general_dilated(
            x, w, window_strides=(stride,), padding=[(pad, pad)],
            dimension_numbers=("NCH", "OIH", "NCH"),
        ) + b[None, :, None]
        if i < n - 1:
            x = jnp.where(x >= 0, x, 0.01 * x)
    if squeeze:
        x = x[0]
    return x


if __name__ == "__main__":
    key = jax.random.PRNGKey(0)
    key, xk, mk = jax.random.split(key, 3)

    B, C_in, L = 2, 4, 32
    n_convs = [8, 16, 8]
    kernel_sizes = [5, 3, 3]
    strides = [2, 1, 2]

    model = CNN1D(C_in, n_convs, kernel_sizes, strides, mk)
    x = jax.random.normal(xk, (B, C_in, L), jnp.float32)

    out = model(x)
    out = jax.block_until_ready(out)

    ref = _reference_forward(model, x)
    assert out.shape == ref.shape, (out.shape, ref.shape)
    assert jnp.allclose(out, ref, atol=2e-4, rtol=2e-4), float(
        jnp.max(jnp.abs(out - ref))
    )

    print("KERNEL_OK")
</pallas_src>

<mosaic_0001>
module attributes {stable_mosaic.version = 11 : i64} {
  func.func @kernel(%arg0: i32, %arg1: memref<4x64xf32, #tpu.memory_space<vmem>>, %arg2: memref<64x72xf32, #tpu.memory_space<vmem>>, %arg3: memref<5x8x4xf32, #tpu.memory_space<vmem>>, %arg4: memref<8x1xf32, #tpu.memory_space<vmem>>, %arg5: memref<68x36xf32, #tpu.memory_space<vmem>>, %arg6: memref<3x16x8xf32, #tpu.memory_space<vmem>>, %arg7: memref<16x1xf32, #tpu.memory_space<vmem>>, %arg8: memref<34x36xf32, #tpu.memory_space<vmem>>, %arg9: memref<3x8x16xf32, #tpu.memory_space<vmem>>, %arg10: memref<8x1xf32, #tpu.memory_space<vmem>>, %arg11: memref<34x128xf32, #tpu.memory_space<vmem>>, %arg12: memref<8x128xf32, #tpu.memory_space<vmem>>) attributes {dimension_semantics = [#tpu.dimension_semantics<arbitrary>], iteration_bounds = array<i64: 1>, scalar_prefetch = 0 : i64, scratch_operands = 0 : i64, tpu.core_type = #tpu.core_type<tc>, window_params = [{pipeline_mode = #tpu.pipeline_mode<synchronous>, transform_indices = @transform_0, window_bounds = array<i64: 4, 64>}, {pipeline_mode = #tpu.pipeline_mode<synchronous>, transform_indices = @transform_1, window_bounds = array<i64: 64, 72>}, {pipeline_mode = #tpu.pipeline_mode<synchronous>, transform_indices = @transform_2, window_bounds = array<i64: 5, 8, 4>}, {pipeline_mode = #tpu.pipeline_mode<synchronous>, transform_indices = @transform_3, window_bounds = array<i64: 8, 1>}, {pipeline_mode = #tpu.pipeline_mode<synchronous>, transform_indices = @transform_4, window_bounds = array<i64: 68, 36>}, {pipeline_mode = #tpu.pipeline_mode<synchronous>, transform_indices = @transform_5, window_bounds = array<i64: 3, 16, 8>}, {pipeline_mode = #tpu.pipeline_mode<synchronous>, transform_indices = @transform_6, window_bounds = array<i64: 16, 1>}, {pipeline_mode = #tpu.pipeline_mode<synchronous>, transform_indices = @transform_7, window_bounds = array<i64: 34, 36>}, {pipeline_mode = #tpu.pipeline_mode<synchronous>, transform_indices = @transform_8, window_bounds = array<i64: 3, 8, 16>}, {pipeline_mode = #tpu.pipeline_mode<synchronous>, transform_indices = @transform_9, window_bounds = array<i64: 8, 1>}, {pipeline_mode = #tpu.pipeline_mode<synchronous>, transform_indices = @transform_10, window_bounds = array<i64: 34, 128>}, {pipeline_mode = #tpu.pipeline_mode<synchronous>, transform_indices = @transform_11, window_bounds = array<i64: 8, 128>}]} {
    %c0 = arith.constant 0 : index
    %c0_0 = arith.constant 0 : index
    %0 = vector.load %arg1[%c0, %c0_0] : memref<4x64xf32, #tpu.memory_space<vmem>>, vector<4x64xf32>
    %c0_1 = arith.constant 0 : index
    %c0_2 = arith.constant 0 : index
    %1 = vector.load %arg2[%c0_1, %c0_2] : memref<64x72xf32, #tpu.memory_space<vmem>>, vector<64x72xf32>
    %cst = arith.constant dense<0.000000e+00> : vector<4x72xf32>
    %2 = tpu.matmul %0, %1, %cst {dimension_numbers = #tpu.dot_dimension_numbers<[1], [0], [0], [1], [0, 0, 1, 1], [], []>} : vector<4x64xf32>, vector<64x72xf32>, vector<4x72xf32> -> vector<4x72xf32>
    %c0_3 = arith.constant 0 : index
    %c0_4 = arith.constant 0 : index
    %c0_5 = arith.constant 0 : index
    %3 = vector.load %arg3[%c0_3, %c0_4, %c0_5] : memref<5x8x4xf32, #tpu.memory_space<vmem>>, vector<1x8x4xf32>
    %4 = vector.shape_cast %3 : vector<1x8x4xf32> to vector<8x4xf32>
    %5 = vector.extract_strided_slice %2 {offsets = [0, 0], sizes = [4, 68], strides = [1, 1]} : vector<4x72xf32> to vector<4x68xf32>
    %cst_6 = arith.constant dense<0.000000e+00> : vector<8x68xf32>
    %6 = tpu.matmul %4, %5, %cst_6 {dimension_numbers = #tpu.dot_dimension_numbers<[1], [0], [0], [1], [0, 0, 1, 1], [], []>} : vector<8x4xf32>, vector<4x68xf32>, vector<8x68xf32> -> vector<8x68xf32>
    %c1 = arith.constant 1 : index
    %c0_7 = arith.constant 0 : index
    %c0_8 = arith.constant 0 : index
    %7 = vector.load %arg3[%c1, %c0_7, %c0_8] : memref<5x8x4xf32, #tpu.memory_space<vmem>>, vector<1x8x4xf32>
    %8 = vector.shape_cast %7 : vector<1x8x4xf32> to vector<8x4xf32>
    %9 = vector.extract_strided_slice %2 {offsets = [0, 1], sizes = [4, 68], strides = [1, 1]} : vector<4x72xf32> to vector<4x68xf32>
    %cst_9 = arith.constant dense<0.000000e+00> : vector<8x68xf32>
    %10 = tpu.matmul %8, %9, %cst_9 {dimension_numbers = #tpu.dot_dimension_numbers<[1], [0], [0], [1], [0, 0, 1, 1], [], []>} : vector<8x4xf32>, vector<4x68xf32>, vector<8x68xf32> -> vector<8x68xf32>
    %11 = arith.addf %6, %10 : vector<8x68xf32>
    %c2 = arith.constant 2 : index
    %c0_10 = arith.constant 0 : index
    %c0_11 = arith.constant 0 : index
    %12 = vector.load %arg3[%c2, %c0_10, %c0_11] : memref<5x8x4xf32, #tpu.memory_space<vmem>>, vector<1x8x4xf32>
    %13 = vector.shape_cast %12 : vector<1x8x4xf32> to vector<8x4xf32>
    %14 = vector.extract_strided_slice %2 {offsets = [0, 2], sizes = [4, 68], strides = [1, 1]} : vector<4x72xf32> to vector<4x68xf32>
    %cst_12 = arith.constant dense<0.000000e+00> : vector<8x68xf32>
    %15 = tpu.matmul %13, %14, %cst_12 {dimension_numbers = #tpu.dot_dimension_numbers<[1], [0], [0], [1], [0, 0, 1, 1], [], []>} : vector<8x4xf32>, vector<4x68xf32>, vector<8x68xf32> -> vector<8x68xf32>
    %16 = arith.addf %11, %15 : vector<8x68xf32>
    %c3 = arith.constant 3 : index
    %c0_13 = arith.constant 0 : index
    %c0_14 = arith.constant 0 : index
    %17 = vector.load %arg3[%c3, %c0_13, %c0_14] : memref<5x8x4xf32, #tpu.memory_space<vmem>>, vector<1x8x4xf32>
    %18 = vector.shape_cast %17 : vector<1x8x4xf32> to vector<8x4xf32>
    %19 = vector.extract_strided_slice %2 {offsets = [0, 3], sizes = [4, 68], strides = [1, 1]} : vector<4x72xf32> to vector<4x68xf32>
    %cst_15 = arith.constant dense<0.000000e+00> : vector<8x68xf32>
    %20 = tpu.matmul %18, %19, %cst_15 {dimension_numbers = #tpu.dot_dimension_numbers<[1], [0], [0], [1], [0, 0, 1, 1], [], []>} : vector<8x4xf32>, vector<4x68xf32>, vector<8x68xf32> -> vector<8x68xf32>
    %21 = arith.addf %16, %20 : vector<8x68xf32>
    %c4 = arith.constant 4 : index
    %c0_16 = arith.constant 0 : index
    %c0_17 = arith.constant 0 : index
    %22 = vector.load %arg3[%c4, %c0_16, %c0_17] : memref<5x8x4xf32, #tpu.memory_space<vmem>>, vector<1x8x4xf32>
    %23 = vector.shape_cast %22 : vector<1x8x4xf32> to vector<8x4xf32>
    %24 = vector.extract_strided_slice %2 {offsets = [0, 4], sizes = [4, 68], strides = [1, 1]} : vector<4x72xf32> to vector<4x68xf32>
    %cst_18 = arith.constant dense<0.000000e+00> : vector<8x68xf32>
    %25 = tpu.matmul %23, %24, %cst_18 {dimension_numbers = #tpu.dot_dimension_numbers<[1], [0], [0], [1], [0, 0, 1, 1], [], []>} : vector<8x4xf32>, vector<4x68xf32>, vector<8x68xf32> -> vector<8x68xf32>
    %26 = arith.addf %21, %25 : vector<8x68xf32>
    %c0_19 = arith.constant 0 : index
    %c0_20 = arith.constant 0 : index
    %27 = vector.load %arg4[%c0_19, %c0_20] : memref<8x1xf32, #tpu.memory_space<vmem>>, vector<8x1xf32>
    %28 = vector.broadcast %27 : vector<8x1xf32> to vector<8x68xf32>
    %29 = arith.addf %26, %28 : vector<8x68xf32>
    %cst_21 = arith.constant 0.000000e+00 : f32
    %30 = vector.broadcast %cst_21 : f32 to vector<8x68xf32>
    %31 = arith.cmpf oge, %29, %30 : vector<8x68xf32>
    %cst_22 = arith.constant 0.00999999977 : f32
    %32 = vector.broadcast %cst_22 : f32 to vector<8x68xf32>
    %33 = arith.mulf %32, %29 : vector<8x68xf32>
    %34 = arith.select %31, %29, %33 : vector<8x68xi1>, vector<8x68xf32>
    %c0_23 = arith.constant 0 : index
    %c0_24 = arith.constant 0 : index
    %35 = vector.load %arg5[%c0_23, %c0_24] : memref<68x36xf32, #tpu.memory_space<vmem>>, vector<68x36xf32>
    %cst_25 = arith.constant dense<0.000000e+00> : vector<8x36xf32>
    %36 = tpu.matmul %34, %35, %cst_25 {dimension_numbers = #tpu.dot_dimension_numbers<[1], [0], [0], [1], [0, 0, 1, 1], [], []>} : vector<8x68xf32>, vector<68x36xf32>, vector<8x36xf32> -> vector<8x36xf32>
    %c0_26 = arith.constant 0 : index
    %c0_27 = arith.constant 0 : index
    %c0_28 = arith.constant 0 : index
    %37 = vector.load %arg6[%c0_26, %c0_27, %c0_28] : memref<3x16x8xf32, #tpu.memory_space<vmem>>, vector<1x16x8xf32>
    %38 = vector.shape_cast %37 : vector<1x16x8xf32> to vector<16x8xf32>
    %39 = vector.extract_strided_slice %36 {offsets = [0, 0], sizes = [8, 34], strides = [1, 1]} : vector<8x36xf32> to vector<8x34xf32>
    %cst_29 = arith.constant dense<0.000000e+00> : vector<16x34xf32>
    %40 = tpu.matmul %38, %39, %cst_29 {dimension_numbers = #tpu.dot_dimension_numbers<[1], [0], [0], [1], [0, 0, 1, 1], [], []>} : vector<16x8xf32>, vector<8x34xf32>, vector<16x34xf32> -> vector<16x34xf32>
    %c1_30 = arith.constant 1 : index
    %c0_31 = arith.constant 0 : index
    %c0_32 = arith.constant 0 : index
    %41 = vector.load %arg6[%c1_30, %c0_31, %c0_32] : memref<3x16x8xf32, #tpu.memory_space<vmem>>, vector<1x16x8xf32>
    %42 = vector.shape_cast %41 : vector<1x16x8xf32> to vector<16x8xf32>
    %43 = vector.extract_strided_slice %36 {offsets = [0, 1], sizes = [8, 34], strides = [1, 1]} : vector<8x36xf32> to vector<8x34xf32>
    %cst_33 = arith.constant dense<0.000000e+00> : vector<16x34xf32>
    %44 = tpu.matmul %42, %43, %cst_33 {dimension_numbers = #tpu.dot_dimension_numbers<[1], [0], [0], [1], [0, 0, 1, 1], [], []>} : vector<16x8xf32>, vector<8x34xf32>, vector<16x34xf32> -> vector<16x34xf32>
    %45 = arith.addf %40, %44 : vector<16x34xf32>
    %c2_34 = arith.constant 2 : index
    %c0_35 = arith.constant 0 : index
    %c0_36 = arith.constant 0 : index
    %46 = vector.load %arg6[%c2_34, %c0_35, %c0_36] : memref<3x16x8xf32, #tpu.memory_space<vmem>>, vector<1x16x8xf32>
    %47 = vector.shape_cast %46 : vector<1x16x8xf32> to vector<16x8xf32>
    %48 = vector.extract_strided_slice %36 {offsets = [0, 2], sizes = [8, 34], strides = [1, 1]} : vector<8x36xf32> to vector<8x34xf32>
    %cst_37 = arith.constant dense<0.000000e+00> : vector<16x34xf32>
    %49 = tpu.matmul %47, %48, %cst_37 {dimension_numbers = #tpu.dot_dimension_numbers<[1], [0], [0], [1], [0, 0, 1, 1], [], []>} : vector<16x8xf32>, vector<8x34xf32>, vector<16x34xf32> -> vector<16x34xf32>
    %50 = arith.addf %45, %49 : vector<16x34xf32>
    %c0_38 = arith.constant 0 : index
    %c0_39 = arith.constant 0 : index
    %51 = vector.load %arg7[%c0_38, %c0_39] : memref<16x1xf32, #tpu.memory_space<vmem>>, vector<16x1xf32>
    %52 = vector.broadcast %51 : vector<16x1xf32> to vector<16x34xf32>
    %53 = arith.addf %50, %52 : vector<16x34xf32>
    %cst_40 = arith.constant 0.000000e+00 : f32
    %54 = vector.broadcast %cst_40 : f32 to vector<16x34xf32>
    %55 = arith.cmpf oge, %53, %54 : vector<16x34xf32>
    %cst_41 = arith.constant 0.00999999977 : f32
    %56 = vector.broadcast %cst_41 : f32 to vector<16x34xf32>
    %57 = arith.mulf %56, %53 : vector<16x34xf32>
    %58 = arith.select %55, %53, %57 : vector<16x34xi1>, vector<16x34xf32>
    %c0_42 = arith.constant 0 : index
    %c0_43 = arith.constant 0 : index
    %59 = vector.load %arg8[%c0_42, %c0_43] : memref<34x36xf32, #tpu.memory_space<vmem>>, vector<34x36xf32>
    %cst_44 = arith.constant dense<0.000000e+00> : vector<16x36xf32>
    %60 = tpu.matmul %58, %59, %cst_44 {dimension_numbers = #tpu.dot_dimension_numbers<[1], [0], [0], [1], [0, 0, 1, 1], [], []>} : vector<16x34xf32>, vector<34x36xf32>, vector<16x36xf32> -> vector<16x36xf32>
    %c0_45 = arith.constant 0 : index
    %c0_46 = arith.constant 0 : index
    %c0_47 = arith.constant 0 : index
    %61 = vector.load %arg9[%c0_45, %c0_46, %c0_47] : memref<3x8x16xf32, #tpu.memory_space<vmem>>, vector<1x8x16xf32>
    %62 = vector.shape_cast %61 : vector<1x8x16xf32> to vector<8x16xf32>
    %63 = vector.extract_strided_slice %60 {offsets = [0, 0], sizes = [16, 34], strides = [1, 1]} : vector<16x36xf32> to vector<16x34xf32>
    %cst_48 = arith.constant dense<0.000000e+00> : vector<8x34xf32>
    %64 = tpu.matmul %62, %63, %cst_48 {dimension_numbers = #tpu.dot_dimension_numbers<[1], [0], [0], [1], [0, 0, 1, 1], [], []>} : vector<8x16xf32>, vector<16x34xf32>, vector<8x34xf32> -> vector<8x34xf32>
    %c1_49 = arith.constant 1 : index
    %c0_50 = arith.constant 0 : index
    %c0_51 = arith.constant 0 : index
    %65 = vector.load %arg9[%c1_49, %c0_50, %c0_51] : memref<3x8x16xf32, #tpu.memory_space<vmem>>, vector<1x8x16xf32>
    %66 = vector.shape_cast %65 : vector<1x8x16xf32> to vector<8x16xf32>
    %67 = vector.extract_strided_slice %60 {offsets = [0, 1], sizes = [16, 34], strides = [1, 1]} : vector<16x36xf32> to vector<16x34xf32>
    %cst_52 = arith.constant dense<0.000000e+00> : vector<8x34xf32>
    %68 = tpu.matmul %66, %67, %cst_52 {dimension_numbers = #tpu.dot_dimension_numbers<[1], [0], [0], [1], [0, 0, 1, 1], [], []>} : vector<8x16xf32>, vector<16x34xf32>, vector<8x34xf32> -> vector<8x34xf32>
    %69 = arith.addf %64, %68 : vector<8x34xf32>
    %c2_53 = arith.constant 2 : index
    %c0_54 = arith.constant 0 : index
    %c0_55 = arith.constant 0 : index
    %70 = vector.load %arg9[%c2_53, %c0_54, %c0_55] : memref<3x8x16xf32, #tpu.memory_space<vmem>>, vector<1x8x16xf32>
    %71 = vector.shape_cast %70 : vector<1x8x16xf32> to vector<8x16xf32>
    %72 = vector.extract_strided_slice %60 {offsets = [0, 2], sizes = [16, 34], strides = [1, 1]} : vector<16x36xf32> to vector<16x34xf32>
    %cst_56 = arith.constant dense<0.000000e+00> : vector<8x34xf32>
    %73 = tpu.matmul %71, %72, %cst_56 {dimension_numbers = #tpu.dot_dimension_numbers<[1], [0], [0], [1], [0, 0, 1, 1], [], []>} : vector<8x16xf32>, vector<16x34xf32>, vector<8x34xf32> -> vector<8x34xf32>
    %74 = arith.addf %69, %73 : vector<8x34xf32>
    %c0_57 = arith.constant 0 : index
    %c0_58 = arith.constant 0 : index
    %75 = vector.load %arg10[%c0_57, %c0_58] : memref<8x1xf32, #tpu.memory_space<vmem>>, vector<8x1xf32>
    %76 = vector.broadcast %75 : vector<8x1xf32> to vector<8x34xf32>
    %77 = arith.addf %74, %76 : vector<8x34xf32>
    %c0_59 = arith.constant 0 : index
    %c0_60 = arith.constant 0 : index
    %78 = vector.load %arg11[%c0_59, %c0_60] : memref<34x128xf32, #tpu.memory_space<vmem>>, vector<34x128xf32>
    %cst_61 = arith.constant dense<0.000000e+00> : vector<8x128xf32>
    %79 = tpu.matmul %77, %78, %cst_61 {dimension_numbers = #tpu.dot_dimension_numbers<[1], [0], [0], [1], [0, 0, 1, 1], [], []>} : vector<8x34xf32>, vector<34x128xf32>, vector<8x128xf32> -> vector<8x128xf32>
    %c0_62 = arith.constant 0 : index
    %c0_63 = arith.constant 0 : index
    %80 = vector.load %arg12[%c0_62, %c0_63] : memref<8x128xf32, #tpu.memory_space<vmem>>, vector<8x128xf32>
    tpu.vector_store %arg12[%c0_62, %c0_63], %79 {strides = array<i32>} : memref<8x128xf32, #tpu.memory_space<vmem>>, vector<8x128xf32>,
    return
  }
  func.func @transform_0(%arg0: i32) -> (i32, i32) {
    %c0_i32 = arith.constant 0 : i32
    %c0_i32_0 = arith.constant 0 : i32
    %c0_i32_1 = arith.constant 0 : i32
    return %c0_i32, %c0_i32_0 : i32, i32
  }
  func.func @transform_1(%arg0: i32) -> (i32, i32) {
    %c0_i32 = arith.constant 0 : i32
    %c0_i32_0 = arith.constant 0 : i32
    %c0_i32_1 = arith.constant 0 : i32
    return %c0_i32, %c0_i32_0 : i32, i32
  }
  func.func @transform_2(%arg0: i32) -> (i32, i32, i32) {
    %c0_i32 = arith.constant 0 : i32
    %c0_i32_0 = arith.constant 0 : i32
    %c0_i32_1 = arith.constant 0 : i32
    %c0_i32_2 = arith.constant 0 : i32
    return %c0_i32, %c0_i32_0, %c0_i32_1 : i32, i32, i32
  }
  func.func @transform_3(%arg0: i32) -> (i32, i32) {
    %c0_i32 = arith.constant 0 : i32
    %c0_i32_0 = arith.constant 0 : i32
    %c0_i32_1 = arith.constant 0 : i32
    return %c0_i32, %c0_i32_0 : i32, i32
  }
  func.func @transform_4(%arg0: i32) -> (i32, i32) {
    %c0_i32 = arith.constant 0 : i32
    %c0_i32_0 = arith.constant 0 : i32
    %c0_i32_1 = arith.constant 0 : i32
    return %c0_i32, %c0_i32_0 : i32, i32
  }
  func.func @transform_5(%arg0: i32) -> (i32, i32, i32) {
    %c0_i32 = arith.constant 0 : i32
    %c0_i32_0 = arith.constant 0 : i32
    %c0_i32_1 = arith.constant 0 : i32
    %c0_i32_2 = arith.constant 0 : i32
    return %c0_i32, %c0_i32_0, %c0_i32_1 : i32, i32, i32
  }
  func.func @transform_6(%arg0: i32) -> (i32, i32) {
    %c0_i32 = arith.constant 0 : i32
    %c0_i32_0 = arith.constant 0 : i32
    %c0_i32_1 = arith.constant 0 : i32
    return %c0_i32, %c0_i32_0 : i32, i32
  }
  func.func @transform_7(%arg0: i32) -> (i32, i32) {
    %c0_i32 = arith.constant 0 : i32
    %c0_i32_0 = arith.constant 0 : i32
    %c0_i32_1 = arith.constant 0 : i32
    return %c0_i32, %c0_i32_0 : i32, i32
  }
  func.func @transform_8(%arg0: i32) -> (i32, i32, i32) {
    %c0_i32 = arith.constant 0 : i32
    %c0_i32_0 = arith.constant 0 : i32
    %c0_i32_1 = arith.constant 0 : i32
    %c0_i32_2 = arith.constant 0 : i32
    return %c0_i32, %c0_i32_0, %c0_i32_1 : i32, i32, i32
  }
  func.func @transform_9(%arg0: i32) -> (i32, i32) {
    %c0_i32 = arith.constant 0 : i32
    %c0_i32_0 = arith.constant 0 : i32
    %c0_i32_1 = arith.constant 0 : i32
    return %c0_i32, %c0_i32_0 : i32, i32
  }
  func.func @transform_10(%arg0: i32) -> (i32, i32) {
    %c0_i32 = arith.constant 0 : i32
    %c0_i32_0 = arith.constant 0 : i32
    %c0_i32_1 = arith.constant 0 : i32
    return %c0_i32, %c0_i32_0 : i32, i32
  }
  func.func @transform_11(%arg0: i32) -> (i32, i32) {
    %c0_i32 = arith.constant 0 : i32
    %c0_i32_0 = arith.constant 0 : i32
    %c0_i32_1 = arith.constant 0 : i32
    return %c0_i32, %c0_i32_0 : i32, i32
  }
}

</mosaic_0001>

<llo_original>
// kernel: tpu_custom_call.1
$region0: #{tpu_custom_call.1}
  #allocation0 [shape = 'u32[]', space=smem, size = 0x4, offset = 0x4, fixed_abs, tag = 'smem constant byte address 0x4 - core index']
  #allocation1 [shape = 'u32[144,128]{1,0:T(1,128)}', space=vmem, size = 0x12000, scoped, tag = 'internal scratch']
  %s0 = inlined_call_operand.vmem [shape: f32[4,64], index: 0, kind: input, shape index: {}]
  %s1 = inlined_call_operand.vmem [shape: f32[64,72], index: 1, kind: input, shape index: {}]
  %s2 = inlined_call_operand.vmem [shape: f32[5,8,4], index: 2, kind: input, shape index: {}]
  %s3 = inlined_call_operand.vmem [shape: f32[8,1], index: 3, kind: input, shape index: {}]
  %s4 = inlined_call_operand.vmem [shape: f32[68,36], index: 4, kind: input, shape index: {}]
  %s5 = inlined_call_operand.vmem [shape: f32[3,16,8], index: 5, kind: input, shape index: {}]
  %s6 = inlined_call_operand.vmem [shape: f32[16,1], index: 6, kind: input, shape index: {}]
  %s7 = inlined_call_operand.vmem [shape: f32[34,36], index: 7, kind: input, shape index: {}]
  %s8 = inlined_call_operand.vmem [shape: f32[3,8,16], index: 8, kind: input, shape index: {}]
  %s9 = inlined_call_operand.vmem [shape: f32[8,1], index: 9, kind: input, shape index: {}]
  %s10 = inlined_call_operand.vmem [shape: f32[34,128], index: 10, kind: input, shape index: {}]
  %s11 = inlined_call_operand.hbm [shape: f32[8,128], index: 11, kind: output, shape index: {}]
  %s12 = sld [smem:[#allocation0]]
  $region54: #{tpu_custom_call.1} parent=0
    _
  %s14 = ssub.s32 1, %s12
  %s15 = scalar_select 0, %s14, %s12
  $region1: #{tpu_custom_call.1} parent=0
    #allocation2 [shape = 'u8[4096]{0}', space=vmem, size = 0x1000, scoped, tag = 'output window, operand 0, single buffered']
    #allocation3 [shape = 's32[1]{0}', space=sflag, size = 0x4, scoped, tag = 'scoped memory for tpu_custom_call.1']
    %16 = vsyncpa [#allocation3], 0
    // Predicated region
    $region2: #{tpu_custom_call.1} parent=1 // pred_check
      _
    $region3: #{tpu_custom_call.1} parent=1 // pred_check_branch
      %18 = sbr.rel (0) target = $region5
    $region4: #{tpu_custom_call.1} parent=1 // pred_region
      _
    $region5: #{tpu_custom_call.1} parent=1 // pred_fallthru
      _
    // Predicated region
    $region6: #{tpu_custom_call.1} parent=1 // pred_check
      _
    $region7: #{tpu_custom_call.1} parent=1 // pred_check_branch
      %20 = sbr.rel (0) target = $region9
    $region8: #{tpu_custom_call.1} parent=1 // pred_region
      _
    $region9: #{tpu_custom_call.1} parent=1 // pred_fallthru
      _
    // Predicated region
    $region10: #{tpu_custom_call.1} parent=1 // pred_check
      _
    $region11: #{tpu_custom_call.1} parent=1 // pred_check_branch
      %22 = sbr.rel (0) target = $region13
    $region12: #{tpu_custom_call.1} parent=1 // pred_region
      _
    $region13: #{tpu_custom_call.1} parent=1 // pred_fallthru
      _
    // Predicated region
    $region14: #{tpu_custom_call.1} parent=1 // pred_check
      _
    $region15: #{tpu_custom_call.1} parent=1 // pred_check_branch
      %24 = sbr.rel (0) target = $region17
    $region16: #{tpu_custom_call.1} parent=1 // pred_region
      _
    $region17: #{tpu_custom_call.1} parent=1 // pred_fallthru
      _
    // Predicated region
    $region18: #{tpu_custom_call.1} parent=1 // pred_check
      _
    $region19: #{tpu_custom_call.1} parent=1 // pred_check_branch
      %26 = sbr.rel (0) target = $region21
    $region20: #{tpu_custom_call.1} parent=1 // pred_region
      _
    $region21: #{tpu_custom_call.1} parent=1 // pred_fallthru
      _
    // Predicated region
    $region22: #{tpu_custom_call.1} parent=1 // pred_check
      _
    $region23: #{tpu_custom_call.1} parent=1 // pred_check_branch
      %28 = sbr.rel (0) target = $region25
    $region24: #{tpu_custom_call.1} parent=1 // pred_region
      _
    $region25: #{tpu_custom_call.1} parent=1 // pred_fallthru
      _
    // Predicated region
    $region26: #{tpu_custom_call.1} parent=1 // pred_check
      _
    $region27: #{tpu_custom_call.1} parent=1 // pred_check_branch
      %30 = sbr.rel (0) target = $region29
    $region28: #{tpu_custom_call.1} parent=1 // pred_region
      _
    $region29: #{tpu_custom_call.1} parent=1 // pred_fallthru
      _
    // Predicated region
    $region30: #{tpu_custom_call.1} parent=1 // pred_check
      _
    $region31: #{tpu_custom_call.1} parent=1 // pred_check_branch
      %32 = sbr.rel (0) target = $region33
    $region32: #{tpu_custom_call.1} parent=1 // pred_region
      _
    $region33: #{tpu_custom_call.1} parent=1 // pred_fallthru
      _
    // Predicated region
    $region34: #{tpu_custom_call.1} parent=1 // pred_check
      _
    $region35: #{tpu_custom_call.1} parent=1 // pred_check_branch
      %34 = sbr.rel (0) target = $region37
    $region36: #{tpu_custom_call.1} parent=1 // pred_region
      _
    $region37: #{tpu_custom_call.1} parent=1 // pred_fallthru
      _
    // Predicated region
    $region38: #{tpu_custom_call.1} parent=1 // pred_check
      _
    $region39: #{tpu_custom_call.1} parent=1 // pred_check_branch
      %36 = sbr.rel (0) target = $region41
    $region40: #{tpu_custom_call.1} parent=1 // pred_region
      _
    $region41: #{tpu_custom_call.1} parent=1 // pred_fallthru
      _
    // Predicated region
    $region42: #{tpu_custom_call.1} parent=1 // pred_check
      _
    $region43: #{tpu_custom_call.1} parent=1 // pred_check_branch
      %38 = sbr.rel (0) target = $region45
    $region44: #{tpu_custom_call.1} parent=1 // pred_region
      _
    $region45: #{tpu_custom_call.1} parent=1 // pred_fallthru
      _
    %v39 = vld [vmem:[%s0] sm:$0xf]
    %v40 = vld [vmem:[%s1] sm:$0xff]
    %v41 = vld [vmem:[%s1 + $0x8] sm:$0xff]
    %v42 = vld [vmem:[%s1 + $0x10] sm:$0xff]
    %v43 = vld [vmem:[%s1 + $0x18] sm:$0xff]
    %v44 = vld [vmem:[%s1 + $0x20] sm:$0xff]
    %v45 = vld [vmem:[%s1 + $0x28] sm:$0xff]
    %v46 = vld [vmem:[%s1 + $0x30] sm:$0xff]
    %v47 = vld [vmem:[%s1 + $0x38] sm:$0xff]
    %vm48 = vcmask 523264
    %v50 = vsel %vm48, %v39, 0
    %52 = vmatprep.subr.mxu0 0.0
    %53 = vmatpush1.msra.mxu0 %v40
    %54 = vmatprep.subr.mxu0 0.0
    %55 = vmatpush1.msra.mxu0 %v41
    %56 = vmatprep.subr.mxu0 0.0
    %57 = vmatpush1.msra.mxu0 %v42
    %58 = vmatprep.subr.mxu0 0.0
    %59 = vmatpush1.msra.mxu0 %v43
    %60 = vmatprep.subr.mxu0 0.0
    %61 = vmatpush1.msra.mxu0 %v44
    %62 = vmatprep.subr.mxu0 0.0
    %63 = vmatpush1.msra.mxu0 %v45
    %64 = vmatprep.subr.mxu0 0.0
    %65 = vmatpush1.msra.mxu0 %v46
    %66 = vmatprep.subr.mxu0 0.0
    %67 = vmatpush1.msra.mxu0 %v47
    %68 = vmatprep.subr.mxu0 0.0
    %69 = vmatpush1.msra.mxu0 0.0
    %70 = vmatprep.subr.mxu0 0.0
    %71 = vmatpush1.msra.mxu0 0.0
    %72 = vmatprep.subr.mxu0 0.0
    %73 = vmatpush1.msra.mxu0 0.0
    %74 = vmatprep.subr.mxu0 0.0
    %75 = vmatpush1.msra.mxu0 0.0
    %76 = vmatprep.subr.mxu0 0.0
    %77 = vmatpush1.msra.mxu0 0.0
    %78 = vmatprep.subr.mxu0 0.0
    %79 = vmatpush1.msra.mxu0 0.0
    %80 = vmatprep.subr.mxu0 0.0
    %81 = vmatpush1.msra.mxu0 0.0
    %82 = vmatprep.subr.mxu0 0.0
    %83 = vmatpush1.msra.mxu0 0.0
    %84 = vmatprep.subr.mxu0 0.0
    %85 = vmatpush1.msra.mxu0 0.0
    %86 = vmatprep.subr.mxu0 0.0
    %87 = vmatpush1.msra.mxu0 0.0
    %88 = vmatprep.subr.mxu0 0.0
    %89 = vmatpush1.msra.mxu0 0.0
    %90 = vmatprep.subr.mxu0 0.0
    %91 = vmatpush1.msra.mxu0 0.0
    %92 = vmatprep.subr.mxu0 0.0
    %93 = vmatpush1.msra.mxu0 0.0
    %94 = vmatprep.subr.mxu0 0.0
    %95 = vmatpush1.msra.mxu0 0.0
    %96 = vmatprep.subr.mxu0 0.0
    %97 = vmatpush1.msra.mxu0 0.0
    %98 = vmatprep.subr.mxu0 0.0
    %99 = vmatpush1.msra.mxu0 0.0
    %100 = vmatprep.subr.mxu0 0.0
    %101 = vmatpush1.msra.mxu0 0.0
    %102 = vmatprep.subr.mxu0 0.0
    %103 = vmatpush1.msra.mxu0 0.0
    %104 = vmatprep.subr.mxu0 0.0
    %105 = vmatpush1.msra.mxu0 0.0
    %106 = vmatprep.subr.mxu0 0.0
    %107 = vmatpush1.msra.mxu0 0.0
    %108 = vmatprep.subr.mxu0 0.0
    %109 = vmatpush1.msra.mxu0 0.0
    %110 = vmatprep.subr.mxu0 0.0
    %111 = vmatpush1.msra.mxu0 0.0
    %112 = vmatprep.subr.mxu0 0.0
    %113 = vmatpush1.msra.mxu0 0.0
    %114 = vmatprep.subr.mxu0 0.0
    %115 = vmatpush1.msra.mxu0 0.0
    %116 = vmatprep.mubr.f32.mxu0 0.0
    %117 = vmatmul.mubr.f32.gmra.mrb[0].mxu0 %v50
    %v118 = vpop.f32.mrb[0].mxu0
    %v119 = vadd.f32 0.0, %v118
    %v120 = vpop.f32.mrb[0].mxu0
    %121 = vdwg.mxu0
    %v122 = vld [vmem:[%s2] sm:$0xff]
    %s123 = scalar_lea.vmem %s2, 8
    %v124 = vld [vmem:[%s123] sm:$0xff]
    %126 = vrot.lane.b32.xlu0 %v119, 127
    %v127 = vpop.permute.xlu0 %126
    %vm128 = vcmask 31744
    %v130 = vsel %vm128, %v124, 0
    %vm132 = vcmask 1043456
    %v133 = vsel %vm132, %v127, 0
    %135 = vmatprep.subr.mxu0 0.0
    %136 = vmatpush1.msra.mxu0 %v133
    %137 = vmatprep.subr.mxu0 0.0
    %138 = vmatpush1.msra.mxu0 0.0
    %139 = vmatprep.subr.mxu0 0.0
    %140 = vmatpush1.msra.mxu0 0.0
    %141 = vmatprep.subr.mxu0 0.0
    %142 = vmatpush1.msra.mxu0 0.0
    %143 = vmatprep.subr.mxu0 0.0
    %144 = vmatpush1.msra.mxu0 0.0
    %145 = vmatprep.subr.mxu0 0.0
    %146 = vmatpush1.msra.mxu0 0.0
    %147 = vmatprep.subr.mxu0 0.0
    %148 = vmatpush1.msra.mxu0 0.0
    %149 = vmatprep.subr.mxu0 0.0
    %150 = vmatpush1.msra.mxu0 0.0
    %151 = vmatprep.subr.mxu0 0.0
    %152 = vmatpush1.msra.mxu0 0.0
    %153 = vmatprep.subr.mxu0 0.0
    %154 = vmatpush1.msra.mxu0 0.0
    %155 = vmatprep.subr.mxu0 0.0
    %156 = vmatpush1.msra.mxu0 0.0
    %157 = vmatprep.subr.mxu0 0.0
    %158 = vmatpush1.msra.mxu0 0.0
    %159 = vmatprep.subr.mxu0 0.0
    %160 = vmatpush1.msra.mxu0 0.0
    %161 = vmatprep.subr.mxu0 0.0
    %162 = vmatpush1.msra.mxu0 0.0
    %163 = vmatprep.subr.mxu0 0.0
    %164 = vmatpush1.msra.mxu0 0.0
    %165 = vmatprep.subr.mxu0 0.0
    %166 = vmatpush1.msra.mxu0 0.0
    %167 = vmatprep.subr.mxu0 0.0
    %168 = vmatpush1.msra.mxu0 0.0
    %169 = vmatprep.subr.mxu0 0.0
    %170 = vmatpush1.msra.mxu0 0.0
    %171 = vmatprep.subr.mxu0 0.0
    %172 = vmatpush1.msra.mxu0 0.0
    %173 = vmatprep.subr.mxu0 0.0
    %174 = vmatpush1.msra.mxu0 0.0
    %175 = vmatprep.subr.mxu0 0.0
    %176 = vmatpush1.msra.mxu0 0.0
    %177 = vmatprep.subr.mxu0 0.0
    %178 = vmatpush1.msra.mxu0 0.0
    %179 = vmatprep.subr.mxu0 0.0
    %180 = vmatpush1.msra.mxu0 0.0
    %181 = vmatprep.subr.mxu0 0.0
    %182 = vmatpush1.msra.mxu0 0.0
    %183 = vmatprep.subr.mxu0 0.0
    %184 = vmatpush1.msra.mxu0 0.0
    %185 = vmatprep.subr.mxu0 0.0
    %186 = vmatpush1.msra.mxu0 0.0
    %187 = vmatprep.subr.mxu0 0.0
    %188 = vmatpush1.msra.mxu0 0.0
    %189 = vmatprep.subr.mxu0 0.0
    %190 = vmatpush1.msra.mxu0 0.0
    %191 = vmatprep.subr.mxu0 0.0
    %192 = vmatpush1.msra.mxu0 0.0
    %193 = vmatprep.subr.mxu0 0.0
    %194 = vmatpush1.msra.mxu0 0.0
    %195 = vmatprep.subr.mxu0 0.0
    %196 = vmatpush1.msra.mxu0 0.0
    %197 = vmatprep.subr.mxu0 0.0
    %198 = vmatpush1.msra.mxu0 0.0
    %199 = vmatprep.mubr.f32.mxu0 0.0
    %200 = vmatmul.mubr.f32.gmra.mrb[0].mxu0 %v130
    %v201 = vpop.f32.mrb[0].mxu0
    %v202 = vadd.f32 0.0, %v201
    %v203 = vpop.f32.mrb[0].mxu0
    %204 = vdwg.mxu0
    %v206 = vsel %vm128, %v122, 0
    %v208 = vsel %vm132, %v119, 0
    %210 = vmatprep.subr.mxu0 0.0
    %211 = vmatpush1.msra.mxu0 %v208
    %212 = vmatprep.subr.mxu0 0.0
    %213 = vmatpush1.msra.mxu0 0.0
    %214 = vmatprep.subr.mxu0 0.0
    %215 = vmatpush1.msra.mxu0 0.0
    %216 = vmatprep.subr.mxu0 0.0
    %217 = vmatpush1.msra.mxu0 0.0
    %218 = vmatprep.subr.mxu0 0.0
    %219 = vmatpush1.msra.mxu0 0.0
    %220 = vmatprep.subr.mxu0 0.0
    %221 = vmatpush1.msra.mxu0 0.0
    %222 = vmatprep.subr.mxu0 0.0
    %223 = vmatpush1.msra.mxu0 0.0
    %224 = vmatprep.subr.mxu0 0.0
    %225 = vmatpush1.msra.mxu0 0.0
    %226 = vmatprep.subr.mxu0 0.0
    %227 = vmatpush1.msra.mxu0 0.0
    %228 = vmatprep.subr.mxu0 0.0
    %229 = vmatpush1.msra.mxu0 0.0
    %230 = vmatprep.subr.mxu0 0.0
    %231 = vmatpush1.msra.mxu0 0.0
    %232 = vmatprep.subr.mxu0 0.0
    %233 = vmatpush1.msra.mxu0 0.0
    %234 = vmatprep.subr.mxu0 0.0
    %235 = vmatpush1.msra.mxu0 0.0
    %236 = vmatprep.subr.mxu0 0.0
    %237 = vmatpush1.msra.mxu0 0.0
    %238 = vmatprep.subr.mxu0 0.0
    %239 = vmatpush1.msra.mxu0 0.0
    %240 = vmatprep.subr.mxu0 0.0
    %241 = vmatpush1.msra.mxu0 0.0
    %242 = vmatprep.subr.mxu0 0.0
    %243 = vmatpush1.msra.mxu0 0.0
    %244 = vmatprep.subr.mxu0 0.0
    %245 = vmatpush1.msra.mxu0 0.0
    %246 = vmatprep.subr.mxu0 0.0
    %247 = vmatpush1.msra.mxu0 0.0
    %248 = vmatprep.subr.mxu0 0.0
    %249 = vmatpush1.msra.mxu0 0.0
    %250 = vmatprep.subr.mxu0 0.0
    %251 = vmatpush1.msra.mxu0 0.0
    %252 = vmatprep.subr.mxu0 0.0
    %253 = vmatpush1.msra.mxu0 0.0
    %254 = vmatprep.subr.mxu0 0.0
    %255 = vmatpush1.msra.mxu0 0.0
    %256 = vmatprep.subr.mxu0 0.0
    %257 = vmatpush1.msra.mxu0 0.0
    %258 = vmatprep.subr.mxu0 0.0
    %259 = vmatpush1.msra.mxu0 0.0
    %260 = vmatprep.subr.mxu0 0.0
    %261 = vmatpush1.msra.mxu0 0.0
    %262 = vmatprep.subr.mxu0 0.0
    %263 = vmatpush1.msra.mxu0 0.0
    %264 = vmatprep.subr.mxu0 0.0
    %265 = vmatpush1.msra.mxu0 0.0
    %266 = vmatprep.subr.mxu0 0.0
    %267 = vmatpush1.msra.mxu0 0.0
    %268 = vmatprep.subr.mxu0 0.0
    %269 = vmatpush1.msra.mxu0 0.0
    %270 = vmatprep.subr.mxu0 0.0
    %271 = vmatpush1.msra.mxu0 0.0
    %272 = vmatprep.subr.mxu0 0.0
    %273 = vmatpush1.msra.mxu0 0.0
    %274 = vmatprep.mubr.f32.mxu0 0.0
    %275 = vmatmul.mubr.f32.gmra.mrb[0].mxu0 %v206
    %v276 = vpop.f32.mrb[0].mxu0
    %v277 = vadd.f32 %v202, %v276
    %v278 = vpop.f32.mrb[0].mxu0
    %279 = vdwg.mxu0
    %s280 = scalar_lea.vmem %s2, 16
    %v281 = vld [vmem:[%s280] sm:$0xff]
    %282 = vrot.lane.b32.xlu0 %v119, 126
    %v283 = vpop.permute.xlu0 %282
    %v285 = vsel %vm128, %v281, 0
    %v287 = vsel %vm132, %v283, 0
    %289 = vmatprep.subr.mxu0 0.0
    %290 = vmatpush1.msra.mxu0 %v287
    %291 = vmatprep.subr.mxu0 0.0
    %292 = vmatpush1.msra.mxu0 0.0
    %293 = vmatprep.subr.mxu0 0.0
    %294 = vmatpush1.msra.mxu0 0.0
    %295 = vmatprep.subr.mxu0 0.0
    %296 = vmatpush1.msra.mxu0 0.0
    %297 = vmatprep.subr.mxu0 0.0
    %298 = vmatpush1.msra.mxu0 0.0
    %299 = vmatprep.subr.mxu0 0.0
    %300 = vmatpush1.msra.mxu0 0.0
    %301 = vmatprep.subr.mxu0 0.0
    %302 = vmatpush1.msra.mxu0 0.0
    %303 = vmatprep.subr.mxu0 0.0
    %304 = vmatpush1.msra.mxu0 0.0
    %305 = vmatprep.subr.mxu0 0.0
    %306 = vmatpush1.msra.mxu0 0.0
    %307 = vmatprep.subr.mxu0 0.0
    %308 = vmatpush1.msra.mxu0 0.0
    %309 = vmatprep.subr.mxu0 0.0
    %310 = vmatpush1.msra.mxu0 0.0
    %311 = vmatprep.subr.mxu0 0.0
    %312 = vmatpush1.msra.mxu0 0.0
    %313 = vmatprep.subr.mxu0 0.0
    %314 = vmatpush1.msra.mxu0 0.0
    %315 = vmatprep.subr.mxu0 0.0
    %316 = vmatpush1.msra.mxu0 0.0
    %317 = vmatprep.subr.mxu0 0.0
    %318 = vmatpush1.msra.mxu0 0.0
    %319 = vmatprep.subr.mxu0 0.0
    %320 = vmatpush1.msra.mxu0 0.0
    %321 = vmatprep.subr.mxu0 0.0
    %322 = vmatpush1.msra.mxu0 0.0
    %323 = vmatprep.subr.mxu0 0.0
    %324 = vmatpush1.msra.mxu0 0.0
    %325 = vmatprep.subr.mxu0 0.0
    %326 = vmatpush1.msra.mxu0 0.0
    %327 = vmatprep.subr.mxu0 0.0
    %328 = vmatpush1.msra.mxu0 0.0
    %329 = vmatprep.subr.mxu0 0.0
    %330 = vmatpush1.msra.mxu0 0.0
    %331 = vmatprep.subr.mxu0 0.0
    %332 = vmatpush1.msra.mxu0 0.0
    %333 = vmatprep.subr.mxu0 0.0
    %334 = vmatpush1.msra.mxu0 0.0
    %335 = vmatprep.subr.mxu0 0.0
    %336 = vmatpush1.msra.mxu0 0.0
    %337 = vmatprep.subr.mxu0 0.0
    %338 = vmatpush1.msra.mxu0 0.0
    %339 = vmatprep.subr.mxu0 0.0
    %340 = vmatpush1.msra.mxu0 0.0
    %341 = vmatprep.subr.mxu0 0.0
    %342 = vmatpush1.msra.mxu0 0.0
    %343 = vmatprep.subr.mxu0 0.0
    %344 = vmatpush1.msra.mxu0 0.0
    %345 = vmatprep.subr.mxu0 0.0
    %346 = vmatpush1.msra.mxu0 0.0
    %347 = vmatprep.subr.mxu0 0.0
    %348 = vmatpush1.msra.mxu0 0.0
    %349 = vmatprep.subr.mxu0 0.0
    %350 = vmatpush1.msra.mxu0 0.0
    %351 = vmatprep.subr.mxu0 0.0
    %352 = vmatpush1.msra.mxu0 0.0
    %353 = vmatprep.mubr.f32.mxu0 0.0
    %354 = vmatmul.mubr.f32.gmra.mrb[0].mxu0 %v285
    %v355 = vpop.f32.mrb[0].mxu0
    %v356 = vadd.f32 0.0, %v355
    %v357 = vpop.f32.mrb[0].mxu0
    %358 = vdwg.mxu0
    %v359 = vadd.f32 %v277, %v356
    %s360 = scalar_lea.vmem %s2, 24
    %v361 = vld [vmem:[%s360] sm:$0xff]
    %362 = vrot.lane.b32.xlu0 %v119, 125
    %v363 = vpop.permute.xlu0 %362
    %v365 = vsel %vm128, %v361, 0
    %v367 = vsel %vm132, %v363, 0
    %369 = vmatprep.subr.mxu0 0.0
    %370 = vmatpush1.msra.mxu0 %v367
    %371 = vmatprep.subr.mxu0 0.0
    %372 = vmatpush1.msra.mxu0 0.0
    %373 = vmatprep.subr.mxu0 0.0
    %374 = vmatpush1.msra.mxu0 0.0
    %375 = vmatprep.subr.mxu0 0.0
    %376 = vmatpush1.msra.mxu0 0.0
    %377 = vmatprep.subr.mxu0 0.0
    %378 = vmatpush1.msra.mxu0 0.0
    %379 = vmatprep.subr.mxu0 0.0
    %380 = vmatpush1.msra.mxu0 0.0
    %381 = vmatprep.subr.mxu0 0.0
    %382 = vmatpush1.msra.mxu0 0.0
    %383 = vmatprep.subr.mxu0 0.0
    %384 = vmatpush1.msra.mxu0 0.0
    %385 = vmatprep.subr.mxu0 0.0
    %386 = vmatpush1.msra.mxu0 0.0
    %387 = vmatprep.subr.mxu0 0.0
    %388 = vmatpush1.msra.mxu0 0.0
    %389 = vmatprep.subr.mxu0 0.0
    %390 = vmatpush1.msra.mxu0 0.0
    %391 = vmatprep.subr.mxu0 0.0
    %392 = vmatpush1.msra.mxu0 0.0
    %393 = vmatprep.subr.mxu0 0.0
    %394 = vmatpush1.msra.mxu0 0.0
    %395 = vmatprep.subr.mxu0 0.0
    %396 = vmatpush1.msra.mxu0 0.0
    %397 = vmatprep.subr.mxu0 0.0
    %398 = vmatpush1.msra.mxu0 0.0
    %399 = vmatprep.subr.mxu0 0.0
    %400 = vmatpush1.msra.mxu0 0.0
    %401 = vmatprep.subr.mxu0 0.0
    %402 = vmatpush1.msra.mxu0 0.0
    %403 = vmatprep.subr.mxu0 0.0
    %404 = vmatpush1.msra.mxu0 0.0
    %405 = vmatprep.subr.mxu0 0.0
    %406 = vmatpush1.msra.mxu0 0.0
    %407 = vmatprep.subr.mxu0 0.0
    %408 = vmatpush1.msra.mxu0 0.0
    %409 = vmatprep.subr.mxu0 0.0
    %410 = vmatpush1.msra.mxu0 0.0
    %411 = vmatprep.subr.mxu0 0.0
    %412 = vmatpush1.msra.mxu0 0.0
    %413 = vmatprep.subr.mxu0 0.0
    %414 = vmatpush1.msra.mxu0 0.0
    %415 = vmatprep.subr.mxu0 0.0
    %416 = vmatpush1.msra.mxu0 0.0
    %417 = vmatprep.subr.mxu0 0.0
    %418 = vmatpush1.msra.mxu0 0.0
    %419 = vmatprep.subr.mxu0 0.0
    %420 = vmatpush1.msra.mxu0 0.0
    %421 = vmatprep.subr.mxu0 0.0
    %422 = vmatpush1.msra.mxu0 0.0
    %423 = vmatprep.subr.mxu0 0.0
    %424 = vmatpush1.msra.mxu0 0.0
    %425 = vmatprep.subr.mxu0 0.0
    %426 = vmatpush1.msra.mxu0 0.0
    %427 = vmatprep.subr.mxu0 0.0
    %428 = vmatpush1.msra.mxu0 0.0
    %429 = vmatprep.subr.mxu0 0.0
    %430 = vmatpush1.msra.mxu0 0.0
    %431 = vmatprep.subr.mxu0 0.0
    %432 = vmatpush1.msra.mxu0 0.0
    %433 = vmatprep.mubr.f32.mxu0 0.0
    %434 = vmatmul.mubr.f32.gmra.mrb[0].mxu0 %v365
    %v435 = vpop.f32.mrb[0].mxu0
    %v436 = vadd.f32 0.0, %v435
    %v437 = vpop.f32.mrb[0].mxu0
    %438 = vdwg.mxu0
    %v439 = vadd.f32 %v359, %v436
    %s440 = scalar_lea.vmem %s2, 32
    %v441 = vld [vmem:[%s440] sm:$0xff]
    %442 = vrot.lane.b32.xlu0 %v119, 124
    %v443 = vpop.permute.xlu0 %442
    %v445 = vsel %vm128, %v441, 0
    %v447 = vsel %vm132, %v443, 0
    %449 = vmatprep.subr.mxu0 0.0
    %450 = vmatpush1.msra.mxu0 %v447
    %451 = vmatprep.subr.mxu0 0.0
    %452 = vmatpush1.msra.mxu0 0.0
    %453 = vmatprep.subr.mxu0 0.0
    %454 = vmatpush1.msra.mxu0 0.0
    %455 = vmatprep.subr.mxu0 0.0
    %456 = vmatpush1.msra.mxu0 0.0
    %457 = vmatprep.subr.mxu0 0.0
    %458 = vmatpush1.msra.mxu0 0.0
    %459 = vmatprep.subr.mxu0 0.0
    %460 = vmatpush1.msra.mxu0 0.0
    %461 = vmatprep.subr.mxu0 0.0
    %462 = vmatpush1.msra.mxu0 0.0
    %463 = vmatprep.subr.mxu0 0.0
    %464 = vmatpush1.msra.mxu0 0.0
    %465 = vmatprep.subr.mxu0 0.0
    %466 = vmatpush1.msra.mxu0 0.0
    %467 = vmatprep.subr.mxu0 0.0
    %468 = vmatpush1.msra.mxu0 0.0
    %469 = vmatprep.subr.mxu0 0.0
    %470 = vmatpush1.msra.mxu0 0.0
    %471 = vmatprep.subr.mxu0 0.0
    %472 = vmatpush1.msra.mxu0 0.0
    %473 = vmatprep.subr.mxu0 0.0
    %474 = vmatpush1.msra.mxu0 0.0
    %475 = vmatprep.subr.mxu0 0.0
    %476 = vmatpush1.msra.mxu0 0.0
    %477 = vmatprep.subr.mxu0 0.0
    %478 = vmatpush1.msra.mxu0 0.0
    %479 = vmatprep.subr.mxu0 0.0
    %480 = vmatpush1.msra.mxu0 0.0
    %481 = vmatprep.subr.mxu0 0.0
    %482 = vmatpush1.msra.mxu0 0.0
    %483 = vmatprep.subr.mxu0 0.0
    %484 = vmatpush1.msra.mxu0 0.0
    %485 = vmatprep.subr.mxu0 0.0
    %486 = vmatpush1.msra.mxu0 0.0
    %487 = vmatprep.subr.mxu0 0.0
    %488 = vmatpush1.msra.mxu0 0.0
    %489 = vmatprep.subr.mxu0 0.0
    %490 = vmatpush1.msra.mxu0 0.0
    %491 = vmatprep.subr.mxu0 0.0
    %492 = vmatpush1.msra.mxu0 0.0
    %493 = vmatprep.subr.mxu0 0.0
    %494 = vmatpush1.msra.mxu0 0.0
    %495 = vmatprep.subr.mxu0 0.0
    %496 = vmatpush1.msra.mxu0 0.0
    %497 = vmatprep.subr.mxu0 0.0
    %498 = vmatpush1.msra.mxu0 0.0
    %499 = vmatprep.subr.mxu0 0.0
    %500 = vmatpush1.msra.mxu0 0.0
    %501 = vmatprep.subr.mxu0 0.0
    %502 = vmatpush1.msra.mxu0 0.0
    %503 = vmatprep.subr.mxu0 0.0
    %504 = vmatpush1.msra.mxu0 0.0
    %505 = vmatprep.subr.mxu0 0.0
    %506 = vmatpush1.msra.mxu0 0.0
    %507 = vmatprep.subr.mxu0 0.0
    %508 = vmatpush1.msra.mxu0 0.0
    %509 = vmatprep.subr.mxu0 0.0
    %510 = vmatpush1.msra.mxu0 0.0
    %511 = vmatprep.subr.mxu0 0.0
    %512 = vmatpush1.msra.mxu0 0.0
    %513 = vmatprep.mubr.f32.mxu0 0.0
    %514 = vmatmul.mubr.f32.gmra.mrb[0].mxu0 %v445
    %v515 = vpop.f32.mrb[0].mxu0
    %v516 = vadd.f32 0.0, %v515
    %v517 = vpop.f32.mrb[0].mxu0
    %518 = vdwg.mxu0
    %v519 = vadd.f32 %v439, %v516
    %v520 = vld [vmem:[%s3] sm:$0xff]
    %522 = vset.pattern.permute.xlu0 0
    %523 = vperm.xlu0 %522, %v520
    %v524 = vpop.permute.xlu0 %523
    %v526 = vadd.f32 %v519, %v524
    %vm527 = vcmp.ge.f32.partialorder %v526, 0.0
    %v528 = vmul.f32 %v526, 0.01
    %v529 = vsel %vm527, %v526, %v528
    %v530 = vld [vmem:[%s4] sm:$0xff]
    %v531 = vld [vmem:[%s4 + $0x8] sm:$0xff]
    %v532 = vld [vmem:[%s4 + $0x10] sm:$0xff]
    %v533 = vld [vmem:[%s4 + $0x18] sm:$0xff]
    %v534 = vld [vmem:[%s4 + $0x20] sm:$0xff]
    %v535 = vld [vmem:[%s4 + $0x28] sm:$0xff]
    %v536 = vld [vmem:[%s4 + $0x30] sm:$0xff]
    %v537 = vld [vmem:[%s4 + $0x38] sm:$0xff]
    %v538 = vld [vmem:[%s4 + $0x40] sm:$0xf]
    %vm539 = vcmask 556032
    %v541 = vsel %vm539, %v529, 0
    %v544 = vsel %vm132, %v538, 0
    %546 = vmatprep.subr.mxu0 0.0
    %547 = vmatpush1.msra.mxu0 %v530
    %548 = vmatprep.subr.mxu0 0.0
    %549 = vmatpush1.msra.mxu0 %v531
    %550 = vmatprep.subr.mxu0 0.0
    %551 = vmatpush1.msra.mxu0 %v532
    %552 = vmatprep.subr.mxu0 0.0
    %553 = vmatpush1.msra.mxu0 %v533
    %554 = vmatprep.subr.mxu0 0.0
    %555 = vmatpush1.msra.mxu0 %v534
    %556 = vmatprep.subr.mxu0 0.0
    %557 = vmatpush1.msra.mxu0 %v535
    %558 = vmatprep.subr.mxu0 0.0
    %559 = vmatpush1.msra.mxu0 %v536
    %560 = vmatprep.subr.mxu0 0.0
    %561 = vmatpush1.msra.mxu0 %v537
    %562 = vmatprep.subr.mxu0 0.0
    %563 = vmatpush1.msra.mxu0 %v544
    %564 = vmatprep.subr.mxu0 0.0
    %565 = vmatpush1.msra.mxu0 0.0
    %566 = vmatprep.subr.mxu0 0.0
    %567 = vmatpush1.msra.mxu0 0.0
    %568 = vmatprep.subr.mxu0 0.0
    %569 = vmatpush1.msra.mxu0 0.0
    %570 = vmatprep.subr.mxu0 0.0
    %571 = vmatpush1.msra.mxu0 0.0
    %572 = vmatprep.subr.mxu0 0.0
    %573 = vmatpush1.msra.mxu0 0.0
    %574 = vmatprep.subr.mxu0 0.0
    %575 = vmatpush1.msra.mxu0 0.0
    %576 = vmatprep.subr.mxu0 0.0
    %577 = vmatpush1.msra.mxu0 0.0
    %578 = vmatprep.subr.mxu0 0.0
    %579 = vmatpush1.msra.mxu0 0.0
    %580 = vmatprep.subr.mxu0 0.0
    %581 = vmatpush1.msra.mxu0 0.0
    %582 = vmatprep.subr.mxu0 0.0
    %583 = vmatpush1.msra.mxu0 0.0
    %584 = vmatprep.subr.mxu0 0.0
    %585 = vmatpush1.msra.mxu0 0.0
    %586 = vmatprep.subr.mxu0 0.0
    %587 = vmatpush1.msra.mxu0 0.0
    %588 = vmatprep.subr.mxu0 0.0
    %589 = vmatpush1.msra.mxu0 0.0
    %590 = vmatprep.subr.mxu0 0.0
    %591 = vmatpush1.msra.mxu0 0.0
    %592 = vmatprep.subr.mxu0 0.0
    %593 = vmatpush1.msra.mxu0 0.0
    %594 = vmatprep.subr.mxu0 0.0
    %595 = vmatpush1.msra.mxu0 0.0
    %596 = vmatprep.subr.mxu0 0.0
    %597 = vmatpush1.msra.mxu0 0.0
    %598 = vmatprep.subr.mxu0 0.0
    %599 = vmatpush1.msra.mxu0 0.0
    %600 = vmatprep.subr.mxu0 0.0
    %601 = vmatpush1.msra.mxu0 0.0
    %602 = vmatprep.subr.mxu0 0.0
    %603 = vmatpush1.msra.mxu0 0.0
    %604 = vmatprep.subr.mxu0 0.0
    %605 = vmatpush1.msra.mxu0 0.0
    %606 = vmatprep.subr.mxu0 0.0
    %607 = vmatpush1.msra.mxu0 0.0
    %608 = vmatprep.subr.mxu0 0.0
    %609 = vmatpush1.msra.mxu0 0.0
    %610 = vmatprep.mubr.f32.mxu0 0.0
    %611 = vmatmul.mubr.f32.gmra.mrb[0].mxu0 %v541
    %v612 = vpop.f32.mrb[0].mxu0
    %v613 = vadd.f32 0.0, %v612
    %v614 = vpop.f32.mrb[0].mxu0
    %615 = vdwg.mxu0
    %v616 = vld [vmem:[%s5] sm:$0xff]
    %v617 = vld [vmem:[%s5 + $0x8] sm:$0xff]
    %s618 = scalar_lea.vmem %s5, 16
    %v619 = vld [vmem:[%s618] sm:$0xff]
    %v620 = vld [vmem:[%s618 + $0x8] sm:$0xff]
    %622 = vrot.lane.b32.xlu0 %v613, 127
    %v623 = vpop.permute.xlu0 %622
    %vm625 = vcmask 64512
    %v627 = vsel %vm625, %v619, 0
    %v630 = vsel %vm625, %v620, 0
    %632 = vmatprep.subr.mxu0 0.0
    %633 = vmatpush1.msra.mxu0 %v623
    %634 = vmatprep.subr.mxu0 0.0
    %635 = vmatpush1.msra.mxu0 0.0
    %636 = vmatprep.subr.mxu0 0.0
    %637 = vmatpush1.msra.mxu0 0.0
    %638 = vmatprep.subr.mxu0 0.0
    %639 = vmatpush1.msra.mxu0 0.0
    %640 = vmatprep.subr.mxu0 0.0
    %641 = vmatpush1.msra.mxu0 0.0
    %642 = vmatprep.subr.mxu0 0.0
    %643 = vmatpush1.msra.mxu0 0.0
    %644 = vmatprep.subr.mxu0 0.0
    %645 = vmatpush1.msra.mxu0 0.0
    %646 = vmatprep.subr.mxu0 0.0
    %647 = vmatpush1.msra.mxu0 0.0
    %648 = vmatprep.subr.mxu0 0.0
    %649 = vmatpush1.msra.mxu0 0.0
    %650 = vmatprep.subr.mxu0 0.0
    %651 = vmatpush1.msra.mxu0 0.0
    %652 = vmatprep.subr.mxu0 0.0
    %653 = vmatpush1.msra.mxu0 0.0
    %654 = vmatprep.subr.mxu0 0.0
    %655 = vmatpush1.msra.mxu0 0.0
    %656 = vmatprep.subr.mxu0 0.0
    %657 = vmatpush1.msra.mxu0 0.0
    %658 = vmatprep.subr.mxu0 0.0
    %659 = vmatpush1.msra.mxu0 0.0
    %660 = vmatprep.subr.mxu0 0.0
    %661 = vmatpush1.msra.mxu0 0.0
    %662 = vmatprep.subr.mxu0 0.0
    %663 = vmatpush1.msra.mxu0 0.0
    %664 = vmatprep.subr.mxu0 0.0
    %665 = vmatpush1.msra.mxu0 0.0
    %666 = vmatprep.subr.mxu0 0.0
    %667 = vmatpush1.msra.mxu0 0.0
    %668 = vmatprep.subr.mxu0 0.0
    %669 = vmatpush1.msra.mxu0 0.0
    %670 = vmatprep.subr.mxu0 0.0
    %671 = vmatpush1.msra.mxu0 0.0
    %672 = vmatprep.subr.mxu0 0.0
    %673 = vmatpush1.msra.mxu0 0.0
    %674 = vmatprep.subr.mxu0 0.0
    %675 = vmatpush1.msra.mxu0 0.0
    %676 = vmatprep.subr.mxu0 0.0
    %677 = vmatpush1.msra.mxu0 0.0
    %678 = vmatprep.subr.mxu0 0.0
    %679 = vmatpush1.msra.mxu0 0.0
    %680 = vmatprep.subr.mxu0 0.0
    %681 = vmatpush1.msra.mxu0 0.0
    %682 = vmatprep.subr.mxu0 0.0
    %683 = vmatpush1.msra.mxu0 0.0
    %684 = vmatprep.subr.mxu0 0.0
    %685 = vmatpush1.msra.mxu0 0.0
    %686 = vmatprep.subr.mxu0 0.0
    %687 = vmatpush1.msra.mxu0 0.0
    %688 = vmatprep.subr.mxu0 0.0
    %689 = vmatpush1.msra.mxu0 0.0
    %690 = vmatprep.subr.mxu0 0.0
    %691 = vmatpush1.msra.mxu0 0.0
    %692 = vmatprep.subr.mxu0 0.0
    %693 = vmatpush1.msra.mxu0 0.0
    %694 = vmatprep.subr.mxu0 0.0
    %695 = vmatpush1.msra.mxu0 0.0
    %696 = vmatprep.mubr.f32.mxu0 0.0
    %697 = vmatmul.mubr.f32.gmra.mrb[0].mxu0 %v627
    %v698 = vpop.f32.mrb[0].mxu0
    %v699 = vadd.f32 0.0, %v698
    %v700 = vpop.f32.mrb[0].mxu0
    %701 = vmatprep.mubr.f32.mxu0 0.0
    %702 = vmatmul.mubr.f32.gmra.mrb[0].mxu0 %v630
    %v703 = vpop.f32.mrb[0].mxu0
    %v704 = vadd.f32 0.0, %v703
    %v705 = vpop.f32.mrb[0].mxu0
    %706 = vdwg.mxu0
    %v708 = vsel %vm625, %v616, 0
    %v711 = vsel %vm625, %v617, 0
    %713 = vmatprep.subr.mxu0 0.0
    %714 = vmatpush1.msra.mxu0 %v613
    %715 = vmatprep.subr.mxu0 0.0
    %716 = vmatpush1.msra.mxu0 0.0
    %717 = vmatprep.subr.mxu0 0.0
    %718 = vmatpush1.msra.mxu0 0.0
    %719 = vmatprep.subr.mxu0 0.0
    %720 = vmatpush1.msra.mxu0 0.0
    %721 = vmatprep.subr.mxu0 0.0
    %722 = vmatpush1.msra.mxu0 0.0
    %723 = vmatprep.subr.mxu0 0.0
    %724 = vmatpush1.msra.mxu0 0.0
    %725 = vmatprep.subr.mxu0 0.0
    %726 = vmatpush1.msra.mxu0 0.0
    %727 = vmatprep.subr.mxu0 0.0
    %728 = vmatpush1.msra.mxu0 0.0
    %729 = vmatprep.subr.mxu0 0.0
    %730 = vmatpush1.msra.mxu0 0.0
    %731 = vmatprep.subr.mxu0 0.0
    %732 = vmatpush1.msra.mxu0 0.0
    %733 = vmatprep.subr.mxu0 0.0
    %734 = vmatpush1.msra.mxu0 0.0
    %735 = vmatprep.subr.mxu0 0.0
    %736 = vmatpush1.msra.mxu0 0.0
    %737 = vmatprep.subr.mxu0 0.0
    %738 = vmatpush1.msra.mxu0 0.0
    %739 = vmatprep.subr.mxu0 0.0
    %740 = vmatpush1.msra.mxu0 0.0
    %741 = vmatprep.subr.mxu0 0.0
    %742 = vmatpush1.msra.mxu0 0.0
    %743 = vmatprep.subr.mxu0 0.0
    %744 = vmatpush1.msra.mxu0 0.0
    %745 = vmatprep.subr.mxu0 0.0
    %746 = vmatpush1.msra.mxu0 0.0
    %747 = vmatprep.subr.mxu0 0.0
    %748 = vmatpush1.msra.mxu0 0.0
    %749 = vmatprep.subr.mxu0 0.0
    %750 = vmatpush1.msra.mxu0 0.0
    %751 = vmatprep.subr.mxu0 0.0
    %752 = vmatpush1.msra.mxu0 0.0
    %753 = vmatprep.subr.mxu0 0.0
    %754 = vmatpush1.msra.mxu0 0.0
    %755 = vmatprep.subr.mxu0 0.0
    %756 = vmatpush1.msra.mxu0 0.0
    %757 = vmatprep.subr.mxu0 0.0
    %758 = vmatpush1.msra.mxu0 0.0
    %759 = vmatprep.subr.mxu0 0.0
    %760 = vmatpush1.msra.mxu0 0.0
    %761 = vmatprep.subr.mxu0 0.0
    %762 = vmatpush1.msra.mxu0 0.0
    %763 = vmatprep.subr.mxu0 0.0
    %764 = vmatpush1.msra.mxu0 0.0
    %765 = vmatprep.subr.mxu0 0.0
    %766 = vmatpush1.msra.mxu0 0.0
    %767 = vmatprep.subr.mxu0 0.0
    %768 = vmatpush1.msra.mxu0 0.0
    %769 = vmatprep.subr.mxu0 0.0
    %770 = vmatpush1.msra.mxu0 0.0
    %771 = vmatprep.subr.mxu0 0.0
    %772 = vmatpush1.msra.mxu0 0.0
    %773 = vmatprep.subr.mxu0 0.0
    %774 = vmatpush1.msra.mxu0 0.0
    %775 = vmatprep.subr.mxu0 0.0
    %776 = vmatpush1.msra.mxu0 0.0
    %777 = vmatprep.mubr.f32.mxu0 0.0
    %778 = vmatmul.mubr.f32.gmra.mrb[0].mxu0 %v708
    %v779 = vpop.f32.mrb[0].mxu0
    %v780 = vadd.f32 %v699, %v779
    %v781 = vpop.f32.mrb[0].mxu0
    %782 = vmatprep.mubr.f32.mxu0 0.0
    %783 = vmatmul.mubr.f32.gmra.mrb[0].mxu0 %v711
    %v784 = vpop.f32.mrb[0].mxu0
    %v785 = vadd.f32 %v704, %v784
    %v786 = vpop.f32.mrb[0].mxu0
    %787 = vdwg.mxu0
    %s788 = scalar_lea.vmem %s5, 32
    %v789 = vld [vmem:[%s788] sm:$0xff]
    %v790 = vld [vmem:[%s788 + $0x8] sm:$0xff]
    %791 = vrot.lane.b32.xlu0 %v613, 126
    %v792 = vpop.permute.xlu0 %791
    %v795 = vsel %vm625, %v789, 0
    %v798 = vsel %vm625, %v790, 0
    %800 = vmatprep.subr.mxu0 0.0
    %801 = vmatpush1.msra.mxu0 %v792
    %802 = vmatprep.subr.mxu0 0.0
    %803 = vmatpush1.msra.mxu0 0.0
    %804 = vmatprep.subr.mxu0 0.0
    %805 = vmatpush1.msra.mxu0 0.0
    %806 = vmatprep.subr.mxu0 0.0
    %807 = vmatpush1.msra.mxu0 0.0
    %808 = vmatprep.subr.mxu0 0.0
    %809 = vmatpush1.msra.mxu0 0.0
    %810 = vmatprep.subr.mxu0 0.0
    %811 = vmatpush1.msra.mxu0 0.0
    %812 = vmatprep.subr.mxu0 0.0
    %813 = vmatpush1.msra.mxu0 0.0
    %814 = vmatprep.subr.mxu0 0.0
    %815 = vmatpush1.msra.mxu0 0.0
    %816 = vmatprep.subr.mxu0 0.0
    %817 = vmatpush1.msra.mxu0 0.0
    %818 = vmatprep.subr.mxu0 0.0
    %819 = vmatpush1.msra.mxu0 0.0
    %820 = vmatprep.subr.mxu0 0.0
    %821 = vmatpush1.msra.mxu0 0.0
    %822 = vmatprep.subr.mxu0 0.0
    %823 = vmatpush1.msra.mxu0 0.0
    %824 = vmatprep.subr.mxu0 0.0
    %825 = vmatpush1.msra.mxu0 0.0
    %826 = vmatprep.subr.mxu0 0.0
    %827 = vmatpush1.msra.mxu0 0.0
    %828 = vmatprep.subr.mxu0 0.0
    %829 = vmatpush1.msra.mxu0 0.0
    %830 = vmatprep.subr.mxu0 0.0
    %831 = vmatpush1.msra.mxu0 0.0
    %832 = vmatprep.subr.mxu0 0.0
    %833 = vmatpush1.msra.mxu0 0.0
    %834 = vmatprep.subr.mxu0 0.0
    %835 = vmatpush1.msra.mxu0 0.0
    %836 = vmatprep.subr.mxu0 0.0
    %837 = vmatpush1.msra.mxu0 0.0
    %838 = vmatprep.subr.mxu0 0.0
    %839 = vmatpush1.msra.mxu0 0.0
    %840 = vmatprep.subr.mxu0 0.0
    %841 = vmatpush1.msra.mxu0 0.0
    %842 = vmatprep.subr.mxu0 0.0
    %843 = vmatpush1.msra.mxu0 0.0
    %844 = vmatprep.subr.mxu0 0.0
    %845 = vmatpush1.msra.mxu0 0.0
    %846 = vmatprep.subr.mxu0 0.0
    %847 = vmatpush1.msra.mxu0 0.0
    %848 = vmatprep.subr.mxu0 0.0
    %849 = vmatpush1.msra.mxu0 0.0
    %850 = vmatprep.subr.mxu0 0.0
    %851 = vmatpush1.msra.mxu0 0.0
    %852 = vmatprep.subr.mxu0 0.0
    %853 = vmatpush1.msra.mxu0 0.0
    %854 = vmatprep.subr.mxu0 0.0
    %855 = vmatpush1.msra.mxu0 0.0
    %856 = vmatprep.subr.mxu0 0.0
    %857 = vmatpush1.msra.mxu0 0.0
    %858 = vmatprep.subr.mxu0 0.0
    %859 = vmatpush1.msra.mxu0 0.0
    %860 = vmatprep.subr.mxu0 0.0
    %861 = vmatpush1.msra.mxu0 0.0
    %862 = vmatprep.subr.mxu0 0.0
    %863 = vmatpush1.msra.mxu0 0.0
    %864 = vmatprep.mubr.f32.mxu0 0.0
    %865 = vmatmul.mubr.f32.gmra.mrb[0].mxu0 %v795
    %v866 = vpop.f32.mrb[0].mxu0
    %v867 = vadd.f32 0.0, %v866
    %v868 = vpop.f32.mrb[0].mxu0
    %869 = vmatprep.mubr.f32.mxu0 0.0
    %870 = vmatmul.mubr.f32.gmra.mrb[0].mxu0 %v798
    %v871 = vpop.f32.mrb[0].mxu0
    %v872 = vadd.f32 0.0, %v871
    %v873 = vpop.f32.mrb[0].mxu0
    %874 = vdwg.mxu0
    %v875 = vadd.f32 %v780, %v867
    %v876 = vadd.f32 %v785, %v872
    %v877 = vld [vmem:[%s6] sm:$0xff]
    %v878 = vld [vmem:[%s6 + $0x8] sm:$0xff]
    %880 = vset.pattern.permute.xlu0 0
    %881 = vperm.xlu0 %880, %v877
    %v882 = vpop.permute.xlu0 %881
    %885 = vset.pattern.permute.xlu0 0
    %886 = vperm.xlu0 %885, %v878
    %v887 = vpop.permute.xlu0 %886
    %v889 = vadd.f32 %v875, %v882
    %v890 = vadd.f32 %v876, %v887
    %vm891 = vcmp.ge.f32.partialorder %v889, 0.0
    %vm892 = vcmp.ge.f32.partialorder %v890, 0.0
    %v893 = vmul.f32 %v889, 0.01
    %v894 = vmul.f32 %v890, 0.01
    %v895 = vsel %vm891, %v889, %v893
    %v896 = vsel %vm892, %v890, %v894
    %v897 = vld [vmem:[%s7] sm:$0xff]
    %v898 = vld [vmem:[%s7 + $0x8] sm:$0xff]
    %v899 = vld [vmem:[%s7 + $0x10] sm:$0xff]
    %v900 = vld [vmem:[%s7 + $0x18] sm:$0xff]
    %v901 = vld [vmem:[%s7 + $0x20] sm:$0x3]
    %vm902 = vcmask 277504
    %v904 = vsel %vm902, %v895, 0
    %v907 = vsel %vm902, %v896, 0
    %vm909 = vcmask 1041408
    %v911 = vsel %vm909, %v901, 0
    %913 = vmatprep.subr.mxu0 0.0
    %914 = vmatpush1.msra.mxu0 %v897
    %915 = vmatprep.subr.mxu0 0.0
    %916 = vmatpush1.msra.mxu0 %v898
    %917 = vmatprep.subr.mxu0 0.0
    %918 = vmatpush1.msra.mxu0 %v899
    %919 = vmatprep.subr.mxu0 0.0
    %920 = vmatpush1.msra.mxu0 %v900
    %921 = vmatprep.subr.mxu0 0.0
    %922 = vmatpush1.msra.mxu0 %v911
    %923 = vmatprep.subr.mxu0 0.0
    %924 = vmatpush1.msra.mxu0 0.0
    %925 = vmatprep.subr.mxu0 0.0
    %926 = vmatpush1.msra.mxu0 0.0
    %927 = vmatprep.subr.mxu0 0.0
    %928 = vmatpush1.msra.mxu0 0.0
    %929 = vmatprep.subr.mxu0 0.0
    %930 = vmatpush1.msra.mxu0 0.0
    %931 = vmatprep.subr.mxu0 0.0
    %932 = vmatpush1.msra.mxu0 0.0
    %933 = vmatprep.subr.mxu0 0.0
    %934 = vmatpush1.msra.mxu0 0.0
    %935 = vmatprep.subr.mxu0 0.0
    %936 = vmatpush1.msra.mxu0 0.0
    %937 = vmatprep.subr.mxu0 0.0
    %938 = vmatpush1.msra.mxu0 0.0
    %939 = vmatprep.subr.mxu0 0.0
    %940 = vmatpush1.msra.mxu0 0.0
    %941 = vmatprep.subr.mxu0 0.0
    %942 = vmatpush1.msra.mxu0 0.0
    %943 = vmatprep.subr.mxu0 0.0
    %944 = vmatpush1.msra.mxu0 0.0
    %945 = vmatprep.subr.mxu0 0.0
    %946 = vmatpush1.msra.mxu0 0.0
    %947 = vmatprep.subr.mxu0 0.0
    %948 = vmatpush1.msra.mxu0 0.0
    %949 = vmatprep.subr.mxu0 0.0
    %950 = vmatpush1.msra.mxu0 0.0
    %951 = vmatprep.subr.mxu0 0.0
    %952 = vmatpush1.msra.mxu0 0.0
    %953 = vmatprep.subr.mxu0 0.0
    %954 = vmatpush1.msra.mxu0 0.0
    %955 = vmatprep.subr.mxu0 0.0
    %956 = vmatpush1.msra.mxu0 0.0
    %957 = vmatprep.subr.mxu0 0.0
    %958 = vmatpush1.msra.mxu0 0.0
    %959 = vmatprep.subr.mxu0 0.0
    %960 = vmatpush1.msra.mxu0 0.0
    %961 = vmatprep.subr.mxu0 0.0
    %962 = vmatpush1.msra.mxu0 0.0
    %963 = vmatprep.subr.mxu0 0.0
    %964 = vmatpush1.msra.mxu0 0.0
    %965 = vmatprep.subr.mxu0 0.0
    %966 = vmatpush1.msra.mxu0 0.0
    %967 = vmatprep.subr.mxu0 0.0
    %968 = vmatpush1.msra.mxu0 0.0
    %969 = vmatprep.subr.mxu0 0.0
    %970 = vmatpush1.msra.mxu0 0.0
    %971 = vmatprep.subr.mxu0 0.0
    %972 = vmatpush1.msra.mxu0 0.0
    %973 = vmatprep.subr.mxu0 0.0
    %974 = vmatpush1.msra.mxu0 0.0
    %975 = vmatprep.subr.mxu0 0.0
    %976 = vmatpush1.msra.mxu0 0.0
    %977 = vmatprep.mubr.f32.mxu0 0.0
    %978 = vmatmul.mubr.f32.gmra.mrb[0].mxu0 %v904
    %v979 = vpop.f32.mrb[0].mxu0
    %v980 = vadd.f32 0.0, %v979
    %v981 = vpop.f32.mrb[0].mxu0
    %982 = vmatprep.mubr.f32.mxu0 0.0
    %983 = vmatmul.mubr.f32.gmra.mrb[0].mxu0 %v907
    %v984 = vpop.f32.mrb[0].mxu0
    %v985 = vadd.f32 0.0, %v984
    %v986 = vpop.f32.mrb[0].mxu0
    %987 = vdwg.mxu0
    %v988 = vld [vmem:[%s8] sm:$0xff]
    %s989 = scalar_lea.vmem %s8, 8
    %v990 = vld [vmem:[%s989] sm:$0xff]
    %993 = vrot.lane.b32.xlu0 %v980, 127
    %v994 = vpop.permute.xlu0 %993
    %995 = vrot.lane.b32.xlu0 %v985, 127
    %v996 = vpop.permute.xlu0 %995
    %vm999 = vcmask 130048
    %v1001 = vsel %vm999, %v990, 0
    %1003 = vmatprep.subr.mxu0 0.0
    %1004 = vmatpush1.msra.mxu0 %v994
    %1005 = vmatprep.subr.mxu0 0.0
    %1006 = vmatpush1.msra.mxu0 %v996
    %1007 = vmatprep.subr.mxu0 0.0
    %1008 = vmatpush1.msra.mxu0 0.0
    %1009 = vmatprep.subr.mxu0 0.0
    %1010 = vmatpush1.msra.mxu0 0.0
    %1011 = vmatprep.subr.mxu0 0.0
    %1012 = vmatpush1.msra.mxu0 0.0
    %1013 = vmatprep.subr.mxu0 0.0
    %1014 = vmatpush1.msra.mxu0 0.0
    %1015 = vmatprep.subr.mxu0 0.0
    %1016 = vmatpush1.msra.mxu0 0.0
    %1017 = vmatprep.subr.mxu0 0.0
    %1018 = vmatpush1.msra.mxu0 0.0
    %1019 = vmatprep.subr.mxu0 0.0
    %1020 = vmatpush1.msra.mxu0 0.0
    %1021 = vmatprep.subr.mxu0 0.0
    %1022 = vmatpush1.msra.mxu0 0.0
    %1023 = vmatprep.subr.mxu0 0.0
    %1024 = vmatpush1.msra.mxu0 0.0
    %1025 = vmatprep.subr.mxu0 0.0
    %1026 = vmatpush1.msra.mxu0 0.0
    %1027 = vmatprep.subr.mxu0 0.0
    %1028 = vmatpush1.msra.mxu0 0.0
    %1029 = vmatprep.subr.mxu0 0.0
    %1030 = vmatpush1.msra.mxu0 0.0
    %1031 = vmatprep.subr.mxu0 0.0
    %1032 = vmatpush1.msra.mxu0 0.0
    %1033 = vmatprep.subr.mxu0 0.0
    %1034 = vmatpush1.msra.mxu0 0.0
    %1035 = vmatprep.subr.mxu0 0.0
    %1036 = vmatpush1.msra.mxu0 0.0
    %1037 = vmatprep.subr.mxu0 0.0
    %1038 = vmatpush1.msra.mxu0 0.0
    %1039 = vmatprep.subr.mxu0 0.0
    %1040 = vmatpush1.msra.mxu0 0.0
    %1041 = vmatprep.subr.mxu0 0.0
    %1042 = vmatpush1.msra.mxu0 0.0
    %1043 = vmatprep.subr.mxu0 0.0
    %1044 = vmatpush1.msra.mxu0 0.0
    %1045 = vmatprep.subr.mxu0 0.0
    %1046 = vmatpush1.msra.mxu0 0.0
    %1047 = vmatprep.subr.mxu0 0.0
    %1048 = vmatpush1.msra.mxu0 0.0
    %1049 = vmatprep.subr.mxu0 0.0
    %1050 = vmatpush1.msra.mxu0 0.0
    %1051 = vmatprep.subr.mxu0 0.0
    %1052 = vmatpush1.msra.mxu0 0.0
    %1053 = vmatprep.subr.mxu0 0.0
    %1054 = vmatpush1.msra.mxu0 0.0
    %1055 = vmatprep.subr.mxu0 0.0
    %1056 = vmatpush1.msra.mxu0 0.0
    %1057 = vmatprep.subr.mxu0 0.0
    %1058 = vmatpush1.msra.mxu0 0.0
    %1059 = vmatprep.subr.mxu0 0.0
    %1060 = vmatpush1.msra.mxu0 0.0
    %1061 = vmatprep.subr.mxu0 0.0
    %1062 = vmatpush1.msra.mxu0 0.0
    %1063 = vmatprep.subr.mxu0 0.0
    %1064 = vmatpush1.msra.mxu0 0.0
    %1065 = vmatprep.subr.mxu0 0.0
    %1066 = vmatpush1.msra.mxu0 0.0
    %1067 = vmatprep.mubr.f32.mxu0 0.0
    %1068 = vmatmul.mubr.f32.gmra.mrb[0].mxu0 %v1001
    %v1069 = vpop.f32.mrb[0].mxu0
    %v1070 = vadd.f32 0.0, %v1069
    %v1071 = vpop.f32.mrb[0].mxu0
    %1072 = vdwg.mxu0
    %v1074 = vsel %vm999, %v988, 0
    %1076 = vmatprep.subr.mxu0 0.0
    %1077 = vmatpush1.msra.mxu0 %v980
    %1078 = vmatprep.subr.mxu0 0.0
    %1079 = vmatpush1.msra.mxu0 %v985
    %1080 = vmatprep.subr.mxu0 0.0
    %1081 = vmatpush1.msra.mxu0 0.0
    %1082 = vmatprep.subr.mxu0 0.0
    %1083 = vmatpush1.msra.mxu0 0.0
    %1084 = vmatprep.subr.mxu0 0.0
    %1085 = vmatpush1.msra.mxu0 0.0
    %1086 = vmatprep.subr.mxu0 0.0
    %1087 = vmatpush1.msra.mxu0 0.0
    %1088 = vmatprep.subr.mxu0 0.0
    %1089 = vmatpush1.msra.mxu0 0.0
    %1090 = vmatprep.subr.mxu0 0.0
    %1091 = vmatpush1.msra.mxu0 0.0
    %1092 = vmatprep.subr.mxu0 0.0
    %1093 = vmatpush1.msra.mxu0 0.0
    %1094 = vmatprep.subr.mxu0 0.0
    %1095 = vmatpush1.msra.mxu0 0.0
    %1096 = vmatprep.subr.mxu0 0.0
    %1097 = vmatpush1.msra.mxu0 0.0
    %1098 = vmatprep.subr.mxu0 0.0
    %1099 = vmatpush1.msra.mxu0 0.0
    %1100 = vmatprep.subr.mxu0 0.0
    %1101 = vmatpush1.msra.mxu0 0.0
    %1102 = vmatprep.subr.mxu0 0.0
    %1103 = vmatpush1.msra.mxu0 0.0
    %1104 = vmatprep.subr.mxu0 0.0
    %1105 = vmatpush1.msra.mxu0 0.0
    %1106 = vmatprep.subr.mxu0 0.0
    %1107 = vmatpush1.msra.mxu0 0.0
    %1108 = vmatprep.subr.mxu0 0.0
    %1109 = vmatpush1.msra.mxu0 0.0
    %1110 = vmatprep.subr.mxu0 0.0
    %1111 = vmatpush1.msra.mxu0 0.0
    %1112 = vmatprep.subr.mxu0 0.0
    %1113 = vmatpush1.msra.mxu0 0.0
    %1114 = vmatprep.subr.mxu0 0.0
    %1115 = vmatpush1.msra.mxu0 0.0
    %1116 = vmatprep.subr.mxu0 0.0
    %1117 = vmatpush1.msra.mxu0 0.0
    %1118 = vmatprep.subr.mxu0 0.0
    %1119 = vmatpush1.msra.mxu0 0.0
    %1120 = vmatprep.subr.mxu0 0.0
    %1121 = vmatpush1.msra.mxu0 0.0
    %1122 = vmatprep.subr.mxu0 0.0
    %1123 = vmatpush1.msra.mxu0 0.0
    %1124 = vmatprep.subr.mxu0 0.0
    %1125 = vmatpush1.msra.mxu0 0.0
    %1126 = vmatprep.subr.mxu0 0.0
    %1127 = vmatpush1.msra.mxu0 0.0
    %1128 = vmatprep.subr.mxu0 0.0
    %1129 = vmatpush1.msra.mxu0 0.0
    %1130 = vmatprep.subr.mxu0 0.0
    %1131 = vmatpush1.msra.mxu0 0.0
    %1132 = vmatprep.subr.mxu0 0.0
    %1133 = vmatpush1.msra.mxu0 0.0
    %1134 = vmatprep.subr.mxu0 0.0
    %1135 = vmatpush1.msra.mxu0 0.0
    %1136 = vmatprep.subr.mxu0 0.0
    %1137 = vmatpush1.msra.mxu0 0.0
    %1138 = vmatprep.subr.mxu0 0.0
    %1139 = vmatpush1.msra.mxu0 0.0
    %1140 = vmatprep.mubr.f32.mxu0 0.0
    %1141 = vmatmul.mubr.f32.gmra.mrb[0].mxu0 %v1074
    %v1142 = vpop.f32.mrb[0].mxu0
    %v1143 = vadd.f32 %v1070, %v1142
    %v1144 = vpop.f32.mrb[0].mxu0
    %1145 = vdwg.mxu0
    %s1146 = scalar_lea.vmem %s8, 16
    %v1147 = vld [vmem:[%s1146] sm:$0xff]
    %1148 = vrot.lane.b32.xlu0 %v980, 126
    %v1149 = vpop.permute.xlu0 %1148
    %1150 = vrot.lane.b32.xlu0 %v985, 126
    %v1151 = vpop.permute.xlu0 %1150
    %v1155 = vsel %vm999, %v1147, 0
    %1157 = vmatprep.subr.mxu0 0.0
    %1158 = vmatpush1.msra.mxu0 %v1149
    %1159 = vmatprep.subr.mxu0 0.0
    %1160 = vmatpush1.msra.mxu0 %v1151
    %1161 = vmatprep.subr.mxu0 0.0
    %1162 = vmatpush1.msra.mxu0 0.0
    %1163 = vmatprep.subr.mxu0 0.0
    %1164 = vmatpush1.msra.mxu0 0.0
    %1165 = vmatprep.subr.mxu0 0.0
    %1166 = vmatpush1.msra.mxu0 0.0
    %1167 = vmatprep.subr.mxu0 0.0
    %1168 = vmatpush1.msra.mxu0 0.0
    %1169 = vmatprep.subr.mxu0 0.0
    %1170 = vmatpush1.msra.mxu0 0.0
    %1171 = vmatprep.subr.mxu0 0.0
    %1172 = vmatpush1.msra.mxu0 0.0
    %1173 = vmatprep.subr.mxu0 0.0
    %1174 = vmatpush1.msra.mxu0 0.0
    %1175 = vmatprep.subr.mxu0 0.0
    %1176 = vmatpush1.msra.mxu0 0.0
    %1177 = vmatprep.subr.mxu0 0.0
    %1178 = vmatpush1.msra.mxu0 0.0
    %1179 = vmatprep.subr.mxu0 0.0
    %1180 = vmatpush1.msra.mxu0 0.0
    %1181 = vmatprep.subr.mxu0 0.0
    %1182 = vmatpush1.msra.mxu0 0.0
    %1183 = vmatprep.subr.mxu0 0.0
    %1184 = vmatpush1.msra.mxu0 0.0
    %1185 = vmatprep.subr.mxu0 0.0
    %1186 = vmatpush1.msra.mxu0 0.0
    %1187 = vmatprep.subr.mxu0 0.0
    %1188 = vmatpush1.msra.mxu0 0.0
    %1189 = vmatprep.subr.mxu0 0.0
    %1190 = vmatpush1.msra.mxu0 0.0
    %1191 = vmatprep.subr.mxu0 0.0
    %1192 = vmatpush1.msra.mxu0 0.0
    %1193 = vmatprep.subr.mxu0 0.0
    %1194 = vmatpush1.msra.mxu0 0.0
    %1195 = vmatprep.subr.mxu0 0.0
    %1196 = vmatpush1.msra.mxu0 0.0
    %1197 = vmatprep.subr.mxu0 0.0
    %1198 = vmatpush1.msra.mxu0 0.0
    %1199 = vmatprep.subr.mxu0 0.0
    %1200 = vmatpush1.msra.mxu0 0.0
    %1201 = vmatprep.subr.mxu0 0.0
    %1202 = vmatpush1.msra.mxu0 0.0
    %1203 = vmatprep.subr.mxu0 0.0
    %1204 = vmatpush1.msra.mxu0 0.0
    %1205 = vmatprep.subr.mxu0 0.0
    %1206 = vmatpush1.msra.mxu0 0.0
    %1207 = vmatprep.subr.mxu0 0.0
    %1208 = vmatpush1.msra.mxu0 0.0
    %1209 = vmatprep.subr.mxu0 0.0
    %1210 = vmatpush1.msra.mxu0 0.0
    %1211 = vmatprep.subr.mxu0 0.0
    %1212 = vmatpush1.msra.mxu0 0.0
    %1213 = vmatprep.subr.mxu0 0.0
    %1214 = vmatpush1.msra.mxu0 0.0
    %1215 = vmatprep.subr.mxu0 0.0
    %1216 = vmatpush1.msra.mxu0 0.0
    %1217 = vmatprep.subr.mxu0 0.0
    %1218 = vmatpush1.msra.mxu0 0.0
    %1219 = vmatprep.subr.mxu0 0.0
    %1220 = vmatpush1.msra.mxu0 0.0
    %1221 = vmatprep.mubr.f32.mxu0 0.0
    %1222 = vmatmul.mubr.f32.gmra.mrb[0].mxu0 %v1155
    %v1223 = vpop.f32.mrb[0].mxu0
    %v1224 = vadd.f32 0.0, %v1223
    %v1225 = vpop.f32.mrb[0].mxu0
    %1226 = vdwg.mxu0
    %v1227 = vadd.f32 %v1143, %v1224
    %v1228 = vld [vmem:[%s9] sm:$0xff]
    %1230 = vset.pattern.permute.xlu0 0
    %1231 = vperm.xlu0 %1230, %v1228
    %v1232 = vpop.permute.xlu0 %1231
    %v1234 = vadd.f32 %v1227, %v1232
    %v1235 = vld [vmem:[%s10] sm:$0xff]
    %v1236 = vld [vmem:[%s10 + $0x8] sm:$0xff]
    %v1237 = vld [vmem:[%s10 + $0x10] sm:$0xff]
    %v1238 = vld [vmem:[%s10 + $0x18] sm:$0xff]
    %v1239 = vld [vmem:[%s10 + $0x20] sm:$0x3]
    %v1241 = vsel %vm902, %v1234, 0
    %v1244 = vsel %vm909, %v1239, 0
    %1246 = vmatprep.subr.mxu0 0.0
    %1247 = vmatpush1.msra.mxu0 %v1235
    %1248 = vmatprep.subr.mxu0 0.0
    %1249 = vmatpush1.msra.mxu0 %v1236
    %1250 = vmatprep.subr.mxu0 0.0
    %1251 = vmatpush1.msra.mxu0 %v1237
    %1252 = vmatprep.subr.mxu0 0.0
    %1253 = vmatpush1.msra.mxu0 %v1238
    %1254 = vmatprep.subr.mxu0 0.0
    %1255 = vmatpush1.msra.mxu0 %v1244
    %1256 = vmatprep.subr.mxu0 0.0
    %1257 = vmatpush1.msra.mxu0 0.0
    %1258 = vmatprep.subr.mxu0 0.0
    %1259 = vmatpush1.msra.mxu0 0.0
    %1260 = vmatprep.subr.mxu0 0.0
    %1261 = vmatpush1.msra.mxu0 0.0
    %1262 = vmatprep.subr.mxu0 0.0
    %1263 = vmatpush1.msra.mxu0 0.0
    %1264 = vmatprep.subr.mxu0 0.0
    %1265 = vmatpush1.msra.mxu0 0.0
    %1266 = vmatprep.subr.mxu0 0.0
    %1267 = vmatpush1.msra.mxu0 0.0
    %1268 = vmatprep.subr.mxu0 0.0
    %1269 = vmatpush1.msra.mxu0 0.0
    %1270 = vmatprep.subr.mxu0 0.0
    %1271 = vmatpush1.msra.mxu0 0.0
    %1272 = vmatprep.subr.mxu0 0.0
    %1273 = vmatpush1.msra.mxu0 0.0
    %1274 = vmatprep.subr.mxu0 0.0
    %1275 = vmatpush1.msra.mxu0 0.0
    %1276 = vmatprep.subr.mxu0 0.0
    %1277 = vmatpush1.msra.mxu0 0.0
    %1278 = vmatprep.subr.mxu0 0.0
    %1279 = vmatpush1.msra.mxu0 0.0
    %1280 = vmatprep.subr.mxu0 0.0
    %1281 = vmatpush1.msra.mxu0 0.0
    %1282 = vmatprep.subr.mxu0 0.0
    %1283 = vmatpush1.msra.mxu0 0.0
    %1284 = vmatprep.subr.mxu0 0.0
    %1285 = vmatpush1.msra.mxu0 0.0
    %1286 = vmatprep.subr.mxu0 0.0
    %1287 = vmatpush1.msra.mxu0 0.0
    %1288 = vmatprep.subr.mxu0 0.0
    %1289 = vmatpush1.msra.mxu0 0.0
    %1290 = vmatprep.subr.mxu0 0.0
    %1291 = vmatpush1.msra.mxu0 0.0
    %1292 = vmatprep.subr.mxu0 0.0
    %1293 = vmatpush1.msra.mxu0 0.0
    %1294 = vmatprep.subr.mxu0 0.0
    %1295 = vmatpush1.msra.mxu0 0.0
    %1296 = vmatprep.subr.mxu0 0.0
    %1297 = vmatpush1.msra.mxu0 0.0
    %1298 = vmatprep.subr.mxu0 0.0
    %1299 = vmatpush1.msra.mxu0 0.0
    %1300 = vmatprep.subr.mxu0 0.0
    %1301 = vmatpush1.msra.mxu0 0.0
    %1302 = vmatprep.subr.mxu0 0.0
    %1303 = vmatpush1.msra.mxu0 0.0
    %1304 = vmatprep.subr.mxu0 0.0
    %1305 = vmatpush1.msra.mxu0 0.0
    %1306 = vmatprep.subr.mxu0 0.0
    %1307 = vmatpush1.msra.mxu0 0.0
    %1308 = vmatprep.subr.mxu0 0.0
    %1309 = vmatpush1.msra.mxu0 0.0
    %1310 = vmatprep.mubr.f32.mxu0 0.0
    %1311 = vmatmul.mubr.f32.gmra.mrb[0].mxu0 %v1241
    %v1312 = vpop.f32.mrb[0].mxu0
    %v1313 = vadd.f32 0.0, %v1312
    %v1314 = vpop.f32.mrb[0].mxu0
    %1315 = vdwg.mxu0
    %1316 = vst [vmem:[#allocation2] sm:$0xff] %v1313
    // Predicated region
    $region46: #{tpu_custom_call.1} parent=1 // pred_check
      _
    $region47: #{tpu_custom_call.1} parent=1 // pred_check_branch
      %1318 = sbr.rel (0) target = $region49
    $region48: #{tpu_custom_call.1} parent=1 // pred_region
      %s1320 = ssub.s32 128, 128
      %1321 = vsyncadd [#allocation3], %s1320
      %s1323 = sshll.u32 [#allocation2], 4
      %s1324 = int_to_ptr.vmem [resolvable:$true] %s1323
      %1326 = dma.vmem_to_hbm [thread:$0]  %s1324, 128, %s11, [#allocation3]
    $region49: #{tpu_custom_call.1} parent=1 // pred_fallthru
      _
    // Predicated region
    $region50: #{tpu_custom_call.1} parent=1 // pred_check
      _
    $region51: #{tpu_custom_call.1} parent=1 // pred_check_branch
      %1328 = sbr.rel (0) target = $region53
    $region52: #{tpu_custom_call.1} parent=1 // pred_region
      %1329 = dma.done [#allocation3], 128
    $region53: #{tpu_custom_call.1} parent=1 // pred_fallthru
      _
    %1330 = vsyncpa [#allocation3], 1

</llo_original>
